<compile_context>
chip_gen: v6e
topology: v6e:2x2x1
jax: 0.10.0
libtpu: 0.0.40
codegen_flags: <defaults>
</compile_context>

<pallas_src>
import math

import jax
import jax.numpy as jnp
import numpy as np
from jax.experimental import pallas as pl
from jax.experimental.pallas import tpu as pltpu


# ------------------------------- kernel -------------------------------------

def _make_kernel(L, I, P, H):
    """Build the kernel for a fixed layer count (no deep-weight operand if L == 1)."""
    G = 4 * H

    def kernel(*refs):
        if L > 1:
            x_ref, hc0_ref, w0s1_ref, w0s2_ref, b_ref, wd_ref, hcy_ref = refs
        else:
            x_ref, hc0_ref, w0s1_ref, w0s2_ref, b_ref, hcy_ref = refs
            wd_ref = None
        f32 = jnp.float32

        # Bias slices from the single packed bias array (all offsets are 128-multiples).
        b1_ih = b_ref[:, 0:P]               # layer-0 ih small_cell stage-1 bias (padded)
        b1_hh = b_ref[:, P:2 * P]           # layer-0 hh small_cell stage-1 bias (padded)
        b2 = b_ref[:, 2 * P:2 * P + G]      # layer-0 summed stage-2 bias (permuted)

        # ---- hoisted recurrent-state (h0) path: independent of the serial chain ----
        hh1 = jnp.maximum(
            jnp.dot(hc0_ref[0, 0].astype(f32), w0s1_ref[I:, :],
                    preferred_element_type=f32) + b1_hh, 0.0)
        ghh = [jnp.dot(hh1, w0s2_ref[:, G:], preferred_element_type=f32) + b2]
        for l in range(1, L):
            bd = b_ref[:, 2 * P + l * G:2 * P + (l + 1) * G]  # summed bih_l + bhh_l
            ghh.append(jnp.dot(hc0_ref[0, l].astype(f32), wd_ref[l - 1, H:, :],
                               preferred_element_type=f32) + bd)

        # ---- serial layer chain: only inp @ W_ih per layer ----
        inp = x_ref[...].astype(f32)
        for l in range(L):                  # static unroll, L is small
            if l == 0:
                ih1 = jnp.maximum(
                    jnp.dot(inp, w0s1_ref[:I, :], preferred_element_type=f32) + b1_ih,
                    0.0)
                gates = jnp.dot(ih1, w0s2_ref[:, :G],
                                preferred_element_type=f32) + ghh[0]
            else:
                gates = jnp.dot(inp, wd_ref[l - 1, :H, :],
                                preferred_element_type=f32) + ghh[l]

            # Packed gate order (wrapper-permuted): i, f, o | c
            #   -> one sigmoid over 3H lanes, one tanh over H lanes.
            s = jax.nn.sigmoid(gates[:, :3 * H])
            i_g = s[:, 0:H]
            f_g = s[:, H:2 * H]
            o_g = s[:, 2 * H:3 * H]
            c_g = jnp.tanh(gates[:, 3 * H:])

            cx = hc0_ref[1, l].astype(f32)
            ncx = f_g * cx + i_g * c_g
            nhx = o_g * jax.nn.sigmoid(ncx)   # reference uses sigmoid(ncx), not tanh

            hcy_ref[0, l] = nhx.astype(hcy_ref.dtype)
            hcy_ref[1, l] = ncx.astype(hcy_ref.dtype)

            # TODO(synk): nn.Dropout(p=0.1) between layers is eval-mode identity here
            # (training-mode dropout is stochastic and not a deterministic forward op).
            inp = nhx

    return kernel


def lstm_cell_forward(x, h0, c0, w0s1, w0s2, b_all, wd):
    """Single Pallas call; all packed operands live whole in VMEM (~1.2 MiB)."""
    L, B, H = h0.shape
    I = x.shape[1]
    P = w0s1.shape[1]
    hc0 = jnp.stack([h0, c0])                              # [2, L, B, H] -> one DMA
    vmem = pl.BlockSpec(memory_space=pltpu.MemorySpace.VMEM)
    args = (x, hc0, w0s1, w0s2, b_all) + ((wd,) if L > 1 else ())
    hcy = pl.pallas_call(
        _make_kernel(L, I, P, H),
        out_shape=jax.ShapeDtypeStruct((2, L, B, H), jnp.float32),
        in_specs=[vmem] * len(args),
        out_specs=vmem,
    )(*args)
    # TODO(synk): a recurrent caller that steps state in place could alias hc0 to the
    # packed output via input_output_aliases; omitted for the single-step forward.
    return hcy[0], hcy[1]


# ----------------------------- wrapper-side packing -------------------------

def _round_up(n, m):
    return ((n + m - 1) // m) * m


def pack_params(layer0, deep, input_size, hidden):
    """Pack all weights/biases into 3 weight arrays + 1 flat bias array.

    - Layer-0 small_cell bottlenecks are zero-padded to a lane-dense width P (>=128).
    - Gate columns are permuted (i,f,c,o) -> (i,f,o,c) so the kernel can activate the
      three sigmoid gates with a single EUP issue.
    - Per-layer (bih + bhh) are pre-summed (exact; they always add into the same gates).
    """
    wih1, bih1, wih2, bih2, whh1, bhh1, whh2, bhh2 = layer0
    I, H = input_size, hidden
    G = 4 * H
    p_ih, p_hh = wih1.shape[1], whh1.shape[1]
    P = max(128, _round_up(max(p_ih, p_hh), 128))

    perm = np.concatenate([np.arange(0, H), np.arange(H, 2 * H),
                           np.arange(3 * H, 4 * H), np.arange(2 * H, 3 * H)])

    def permg(a):                      # permute the 4H gate axis (last axis)
        return a[..., perm]

    # Stage 1 of both layer-0 small_cells: rows 0:I = ih path, I: = hh path.
    w0s1 = jnp.zeros((I + H, P), jnp.float32)
    w0s1 = w0s1.at[:I, :p_ih].set(wih1).at[I:, :p_hh].set(whh1)
    b1 = jnp.zeros((2 * P,), jnp.float32)
    b1 = b1.at[:p_ih].set(bih1).at[P:P + p_hh].set(bhh1)

    # Stage 2: lanes 0:4H = ih path, 4H: = hh path (gate columns permuted).
    w0s2 = jnp.zeros((P, 2 * G), jnp.float32)
    w0s2 = w0s2.at[:p_ih, :G].set(permg(wih2)).at[:p_hh, G:].set(permg(whh2))
    b2 = permg(bih2 + bhh2)

    biases = [b1, b2]
    if deep:
        wd = jnp.stack([jnp.concatenate([permg(wih), permg(whh)], axis=0)
                        for (wih, _, whh, _) in deep])          # [L-1, 2H, 4H]
        for (_, bih, _, bhh) in deep:
            biases.append(permg(bih + bhh))
    else:
        wd = None                      # nlayers == 1: no deep-layer operand at all
    b_all = jnp.concatenate(biases)[None, :]                    # [1, 2P + L*4H]
    return w0s1, w0s2, b_all, wd


# --------------------------- reference & test --------------------------------

def _linear_params(key, in_f, out_f):
    """PyTorch nn.Linear-style deterministic init; weight stored as [in, out]."""
    kw, kb = jax.random.split(key)
    k = 1.0 / math.sqrt(in_f)
    w = jax.random.uniform(kw, (in_f, out_f), jnp.float32, -k, k)
    b = jax.random.uniform(kb, (out_f,), jnp.float32, -k, k)
    return w, b


def _reference(x, h0, c0, layer0, deep):
    """Pure-JAX transcription of the PyTorch forward (eval mode, original gate order)."""
    wih1, bih1, wih2, bih2, whh1, bhh1, whh2, bhh2 = layer0
    L, _, H = h0.shape
    inp = x
    hy, cy = [], []
    for i in range(L):
        hx, cx = h0[i], c0[i]
        if i == 0:
            g = (jnp.maximum(inp @ wih1 + bih1, 0.0) @ wih2 + bih2
                 + jnp.maximum(hx @ whh1 + bhh1, 0.0) @ whh2 + bhh2)
        else:
            wih, bih, whh, bhh = deep[i - 1]
            g = inp @ wih + bih + hx @ whh + bhh
        i_g = jax.nn.sigmoid(g[:, :H])
        f_g = jax.nn.sigmoid(g[:, H:2 * H])
        c_g = jnp.tanh(g[:, 2 * H:3 * H])
        o_g = jax.nn.sigmoid(g[:, 3 * H:])
        ncx = f_g * cx + i_g * c_g
        nhx = o_g * jax.nn.sigmoid(ncx)
        hy.append(nhx)
        cy.append(ncx)
        inp = nhx
    return jnp.stack(hy), jnp.stack(cy)


if __name__ == "__main__":
    B = 8          # batch
    INPUT = 128    # input_size
    HIDDEN = 128   # hidden_size (lane-dense)
    NLAYERS = 2

    root = jax.random.PRNGKey(0)
    k_in, k_h, k_c, k_p = jax.random.split(root, 4)

    x = jax.random.normal(k_in, (B, INPUT), jnp.float32)
    h0 = jax.random.normal(k_h, (NLAYERS, B, HIDDEN), jnp.float32)
    c0 = jax.random.normal(k_c, (NLAYERS, B, HIDDEN), jnp.float32)

    pk = jax.random.split(k_p, 4 + 2 * max(NLAYERS - 1, 1))
    # layer 0: two small_cells
    wih1, bih1 = _linear_params(pk[0], INPUT, INPUT // 4)
    wih2, bih2 = _linear_params(pk[1], INPUT // 4, 4 * HIDDEN)
    whh1, bhh1 = _linear_params(pk[2], HIDDEN, HIDDEN // 4)
    whh2, bhh2 = _linear_params(pk[3], HIDDEN // 4, 4 * HIDDEN)
    layer0 = (wih1, bih1, wih2, bih2, whh1, bhh1, whh2, bhh2)
    # layers > 0: plain Linear pairs
    deep = []
    for i in range(NLAYERS - 1):
        wih, bih = _linear_params(pk[4 + 2 * i], HIDDEN, 4 * HIDDEN)
        whh, bhh = _linear_params(pk[5 + 2 * i], HIDDEN, 4 * HIDDEN)
        deep.append((wih, bih, whh, bhh))

    # ---- multi-layer case ----
    w0s1, w0s2, b_all, wd = pack_params(layer0, deep, INPUT, HIDDEN)
    hy, cy = lstm_cell_forward(x, h0, c0, w0s1, w0s2, b_all, wd)
    jax.block_until_ready((hy, cy))

    ref_hy, ref_cy = _reference(x, h0, c0, layer0, deep)
    assert hy.shape == (NLAYERS, B, HIDDEN) and cy.shape == (NLAYERS, B, HIDDEN)
    np.testing.assert_allclose(np.asarray(hy), np.asarray(ref_hy),
                               rtol=1e-5, atol=1e-5)
    np.testing.assert_allclose(np.asarray(cy), np.asarray(ref_cy),
                               rtol=1e-5, atol=1e-5)

    # ---- nlayers == 1 variant (no deep-layer operand is DMA'd) ----
    w0s1_1, w0s2_1, b_all_1, wd_1 = pack_params(layer0, [], INPUT, HIDDEN)
    hy1, cy1 = lstm_cell_forward(x, h0[:1], c0[:1], w0s1_1, w0s2_1, b_all_1, wd_1)
    jax.block_until_ready((hy1, cy1))
    ref_hy1, ref_cy1 = _reference(x, h0[:1], c0[:1], layer0, [])
    np.testing.assert_allclose(np.asarray(hy1), np.asarray(ref_hy1),
                               rtol=1e-5, atol=1e-5)
    np.testing.assert_allclose(np.asarray(cy1), np.asarray(ref_cy1),
                               rtol=1e-5, atol=1e-5)

    # TODO(synk): for v5e a bf16 weight cast (with a loosened tolerance) would halve
    # weight HBM traffic; kept f32 here to preserve the 1e-5 parity check.

    print("KERNEL_OK")
</pallas_src>

<mosaic_0001>
module attributes {stable_mosaic.version = 11 : i64} {
  func.func @kernel(%arg0: memref<8x128xf32, #tpu.memory_space<vmem>>, %arg1: memref<2x2x8x128xf32, #tpu.memory_space<vmem>>, %arg2: memref<256x128xf32, #tpu.memory_space<vmem>>, %arg3: memref<128x1024xf32, #tpu.memory_space<vmem>>, %arg4: memref<1x1280xf32, #tpu.memory_space<vmem>>, %arg5: memref<1x256x512xf32, #tpu.memory_space<vmem>>, %arg6: memref<2x2x8x128xf32, #tpu.memory_space<vmem>>) attributes {dimension_semantics = [], scalar_prefetch = 0 : i64, scratch_operands = 0 : i64, tpu.core_type = #tpu.core_type<tc>} {
    %c0 = arith.constant 0 : index
    %c0_0 = arith.constant 0 : index
    %0 = vector.load %arg4[%c0, %c0_0] : memref<1x1280xf32, #tpu.memory_space<vmem>>, vector<1x128xf32>
    %c0_1 = arith.constant 0 : index
    %c128 = arith.constant 128 : index
    %1 = vector.load %arg4[%c0_1, %c128] : memref<1x1280xf32, #tpu.memory_space<vmem>>, vector<1x128xf32>
    %c0_2 = arith.constant 0 : index
    %c256 = arith.constant 256 : index
    %2 = vector.load %arg4[%c0_2, %c256] : memref<1x1280xf32, #tpu.memory_space<vmem>>, vector<1x512xf32>
    %c0_3 = arith.constant 0 : index
    %c0_4 = arith.constant 0 : index
    %c0_5 = arith.constant 0 : index
    %c0_6 = arith.constant 0 : index
    %3 = vector.load %arg1[%c0_3, %c0_4, %c0_5, %c0_6] : memref<2x2x8x128xf32, #tpu.memory_space<vmem>>, vector<1x1x8x128xf32>
    %4 = vector.shape_cast %3 : vector<1x1x8x128xf32> to vector<8x128xf32>
    %c128_7 = arith.constant 128 : index
    %c0_8 = arith.constant 0 : index
    %5 = vector.load %arg2[%c128_7, %c0_8] : memref<256x128xf32, #tpu.memory_space<vmem>>, vector<128x128xf32>
    %cst = arith.constant dense<0.000000e+00> : vector<8x128xf32>
    %6 = tpu.matmul %4, %5, %cst {dimension_numbers = #tpu.dot_dimension_numbers<[1], [0], [0], [1], [0, 0, 1, 1], [], []>} : vector<8x128xf32>, vector<128x128xf32>, vector<8x128xf32> -> vector<8x128xf32>
    %7 = vector.broadcast %1 : vector<1x128xf32> to vector<8x128xf32>
    %8 = arith.addf %6, %7 : vector<8x128xf32>
    %cst_9 = arith.constant 0.000000e+00 : f32
    %9 = vector.broadcast %cst_9 : f32 to vector<8x128xf32>
    %10 = arith.maximumf %8, %9 : vector<8x128xf32>
    %c0_10 = arith.constant 0 : index
    %c512 = arith.constant 512 : index
    %11 = vector.load %arg3[%c0_10, %c512] : memref<128x1024xf32, #tpu.memory_space<vmem>>, vector<128x512xf32>
    %cst_11 = arith.constant dense<0.000000e+00> : vector<8x512xf32>
    %12 = tpu.matmul %10, %11, %cst_11 {dimension_numbers = #tpu.dot_dimension_numbers<[1], [0], [0], [1], [0, 0, 1, 1], [], []>} : vector<8x128xf32>, vector<128x512xf32>, vector<8x512xf32> -> vector<8x512xf32>
    %13 = vector.broadcast %2 : vector<1x512xf32> to vector<8x512xf32>
    %14 = arith.addf %12, %13 : vector<8x512xf32>
    %c0_12 = arith.constant 0 : index
    %c768 = arith.constant 768 : index
    %15 = vector.load %arg4[%c0_12, %c768] : memref<1x1280xf32, #tpu.memory_space<vmem>>, vector<1x512xf32>
    %c0_13 = arith.constant 0 : index
    %c1 = arith.constant 1 : index
    %c0_14 = arith.constant 0 : index
    %c0_15 = arith.constant 0 : index
    %16 = vector.load %arg1[%c0_13, %c1, %c0_14, %c0_15] : memref<2x2x8x128xf32, #tpu.memory_space<vmem>>, vector<1x1x8x128xf32>
    %17 = vector.shape_cast %16 : vector<1x1x8x128xf32> to vector<8x128xf32>
    %c0_16 = arith.constant 0 : index
    %c128_17 = arith.constant 128 : index
    %c0_18 = arith.constant 0 : index
    %18 = vector.load %arg5[%c0_16, %c128_17, %c0_18] : memref<1x256x512xf32, #tpu.memory_space<vmem>>, vector<1x128x512xf32>
    %19 = vector.shape_cast %18 : vector<1x128x512xf32> to vector<128x512xf32>
    %cst_19 = arith.constant dense<0.000000e+00> : vector<8x512xf32>
    %20 = tpu.matmul %17, %19, %cst_19 {dimension_numbers = #tpu.dot_dimension_numbers<[1], [0], [0], [1], [0, 0, 1, 1], [], []>} : vector<8x128xf32>, vector<128x512xf32>, vector<8x512xf32> -> vector<8x512xf32>
    %21 = vector.broadcast %15 : vector<1x512xf32> to vector<8x512xf32>
    %22 = arith.addf %20, %21 : vector<8x512xf32>
    %c0_20 = arith.constant 0 : index
    %c0_21 = arith.constant 0 : index
    %23 = vector.load %arg0[%c0_20, %c0_21] : memref<8x128xf32, #tpu.memory_space<vmem>>, vector<8x128xf32>
    %c0_22 = arith.constant 0 : index
    %c0_23 = arith.constant 0 : index
    %24 = vector.load %arg2[%c0_22, %c0_23] : memref<256x128xf32, #tpu.memory_space<vmem>>, vector<128x128xf32>
    %cst_24 = arith.constant dense<0.000000e+00> : vector<8x128xf32>
    %25 = tpu.matmul %23, %24, %cst_24 {dimension_numbers = #tpu.dot_dimension_numbers<[1], [0], [0], [1], [0, 0, 1, 1], [], []>} : vector<8x128xf32>, vector<128x128xf32>, vector<8x128xf32> -> vector<8x128xf32>
    %26 = vector.broadcast %0 : vector<1x128xf32> to vector<8x128xf32>
    %27 = arith.addf %25, %26 : vector<8x128xf32>
    %cst_25 = arith.constant 0.000000e+00 : f32
    %28 = vector.broadcast %cst_25 : f32 to vector<8x128xf32>
    %29 = arith.maximumf %27, %28 : vector<8x128xf32>
    %c0_26 = arith.constant 0 : index
    %c0_27 = arith.constant 0 : index
    %30 = vector.load %arg3[%c0_26, %c0_27] : memref<128x1024xf32, #tpu.memory_space<vmem>>, vector<128x512xf32>
    %cst_28 = arith.constant dense<0.000000e+00> : vector<8x512xf32>
    %31 = tpu.matmul %29, %30, %cst_28 {dimension_numbers = #tpu.dot_dimension_numbers<[1], [0], [0], [1], [0, 0, 1, 1], [], []>} : vector<8x128xf32>, vector<128x512xf32>, vector<8x512xf32> -> vector<8x512xf32>
    %32 = arith.addf %31, %14 : vector<8x512xf32>
    %33 = vector.extract_strided_slice %32 {offsets = [0, 0], sizes = [8, 384], strides = [1, 1]} : vector<8x512xf32> to vector<8x384xf32>
    %34 = arith.negf %33 : vector<8x384xf32>
    %35 = math.exp %34 : vector<8x384xf32>
    %cst_29 = arith.constant 1.000000e+00 : f32
    %36 = vector.broadcast %cst_29 : f32 to vector<8x384xf32>
    %37 = arith.addf %36, %35 : vector<8x384xf32>
    %38 = arith.divf %36, %37 : vector<8x384xf32>
    %39 = vector.extract_strided_slice %38 {offsets = [0, 0], sizes = [8, 128], strides = [1, 1]} : vector<8x384xf32> to vector<8x128xf32>
    %40 = vector.extract_strided_slice %38 {offsets = [0, 128], sizes = [8, 128], strides = [1, 1]} : vector<8x384xf32> to vector<8x128xf32>
    %41 = vector.extract_strided_slice %38 {offsets = [0, 256], sizes = [8, 128], strides = [1, 1]} : vector<8x384xf32> to vector<8x128xf32>
    %42 = vector.extract_strided_slice %32 {offsets = [0, 384], sizes = [8, 128], strides = [1, 1]} : vector<8x512xf32> to vector<8x128xf32>
    %43 = math.tanh %42 : vector<8x128xf32>
    %c1_30 = arith.constant 1 : index
    %c0_31 = arith.constant 0 : index
    %c0_32 = arith.constant 0 : index
    %c0_33 = arith.constant 0 : index
    %44 = vector.load %arg1[%c1_30, %c0_31, %c0_32, %c0_33] : memref<2x2x8x128xf32, #tpu.memory_space<vmem>>, vector<1x1x8x128xf32>
    %45 = vector.shape_cast %44 : vector<1x1x8x128xf32> to vector<8x128xf32>
    %46 = arith.mulf %40, %45 : vector<8x128xf32>
    %47 = arith.mulf %39, %43 : vector<8x128xf32>
    %48 = arith.addf %46, %47 : vector<8x128xf32>
    %49 = arith.negf %48 : vector<8x128xf32>
    %50 = math.exp %49 : vector<8x128xf32>
    %cst_34 = arith.constant 1.000000e+00 : f32
    %51 = vector.broadcast %cst_34 : f32 to vector<8x128xf32>
    %52 = arith.addf %51, %50 : vector<8x128xf32>
    %53 = arith.divf %51, %52 : vector<8x128xf32>
    %54 = arith.mulf %41, %53 : vector<8x128xf32>
    %c0_35 = arith.constant 0 : index
    %c0_36 = arith.constant 0 : index
    %c0_37 = arith.constant 0 : index
    %c0_38 = arith.constant 0 : index
    %55 = vector.load %arg6[%c0_35, %c0_36, %c0_37, %c0_38] : memref<2x2x8x128xf32, #tpu.memory_space<vmem>>, vector<1x1x8x128xf32>
    %56 = vector.shape_cast %55 : vector<1x1x8x128xf32> to vector<8x128xf32>
    %57 = vector.shape_cast %54 : vector<8x128xf32> to vector<1x1x8x128xf32>
    tpu.vector_store %arg6[%c0_35, %c0_36, %c0_37, %c0_38], %57 {strides = array<i32>} : memref<2x2x8x128xf32, #tpu.memory_space<vmem>>, vector<1x1x8x128xf32>,
    %c1_39 = arith.constant 1 : index
    %c0_40 = arith.constant 0 : index
    %c0_41 = arith.constant 0 : index
    %c0_42 = arith.constant 0 : index
    %58 = vector.load %arg6[%c1_39, %c0_40, %c0_41, %c0_42] : memref<2x2x8x128xf32, #tpu.memory_space<vmem>>, vector<1x1x8x128xf32>
    %59 = vector.shape_cast %58 : vector<1x1x8x128xf32> to vector<8x128xf32>
    %60 = vector.shape_cast %48 : vector<8x128xf32> to vector<1x1x8x128xf32>
    tpu.vector_store %arg6[%c1_39, %c0_40, %c0_41, %c0_42], %60 {strides = array<i32>} : memref<2x2x8x128xf32, #tpu.memory_space<vmem>>, vector<1x1x8x128xf32>,
    %c0_43 = arith.constant 0 : index
    %c0_44 = arith.constant 0 : index
    %c0_45 = arith.constant 0 : index
    %61 = vector.load %arg5[%c0_43, %c0_44, %c0_45] : memref<1x256x512xf32, #tpu.memory_space<vmem>>, vector<1x128x512xf32>
    %62 = vector.shape_cast %61 : vector<1x128x512xf32> to vector<128x512xf32>
    %cst_46 = arith.constant dense<0.000000e+00> : vector<8x512xf32>
    %63 = tpu.matmul %54, %62, %cst_46 {dimension_numbers = #tpu.dot_dimension_numbers<[1], [0], [0], [1], [0, 0, 1, 1], [], []>} : vector<8x128xf32>, vector<128x512xf32>, vector<8x512xf32> -> vector<8x512xf32>
    %64 = arith.addf %63, %22 : vector<8x512xf32>
    %65 = vector.extract_strided_slice %64 {offsets = [0, 0], sizes = [8, 384], strides = [1, 1]} : vector<8x512xf32> to vector<8x384xf32>
    %66 = arith.negf %65 : vector<8x384xf32>
    %67 = math.exp %66 : vector<8x384xf32>
    %cst_47 = arith.constant 1.000000e+00 : f32
    %68 = vector.broadcast %cst_47 : f32 to vector<8x384xf32>
    %69 = arith.addf %68, %67 : vector<8x384xf32>
    %70 = arith.divf %68, %69 : vector<8x384xf32>
    %71 = vector.extract_strided_slice %70 {offsets = [0, 0], sizes = [8, 128], strides = [1, 1]} : vector<8x384xf32> to vector<8x128xf32>
    %72 = vector.extract_strided_slice %70 {offsets = [0, 128], sizes = [8, 128], strides = [1, 1]} : vector<8x384xf32> to vector<8x128xf32>
    %73 = vector.extract_strided_slice %70 {offsets = [0, 256], sizes = [8, 128], strides = [1, 1]} : vector<8x384xf32> to vector<8x128xf32>
    %74 = vector.extract_strided_slice %64 {offsets = [0, 384], sizes = [8, 128], strides = [1, 1]} : vector<8x512xf32> to vector<8x128xf32>
    %75 = math.tanh %74 : vector<8x128xf32>
    %c1_48 = arith.constant 1 : index
    %c1_49 = arith.constant 1 : index
    %c0_50 = arith.constant 0 : index
    %c0_51 = arith.constant 0 : index
    %76 = vector.load %arg1[%c1_48, %c1_49, %c0_50, %c0_51] : memref<2x2x8x128xf32, #tpu.memory_space<vmem>>, vector<1x1x8x128xf32>
    %77 = vector.shape_cast %76 : vector<1x1x8x128xf32> to vector<8x128xf32>
    %78 = arith.mulf %72, %77 : vector<8x128xf32>
    %79 = arith.mulf %71, %75 : vector<8x128xf32>
    %80 = arith.addf %78, %79 : vector<8x128xf32>
    %81 = arith.negf %80 : vector<8x128xf32>
    %82 = math.exp %81 : vector<8x128xf32>
    %cst_52 = arith.constant 1.000000e+00 : f32
    %83 = vector.broadcast %cst_52 : f32 to vector<8x128xf32>
    %84 = arith.addf %83, %82 : vector<8x128xf32>
    %85 = arith.divf %83, %84 : vector<8x128xf32>
    %86 = arith.mulf %73, %85 : vector<8x128xf32>
    %c0_53 = arith.constant 0 : index
    %c1_54 = arith.constant 1 : index
    %c0_55 = arith.constant 0 : index
    %c0_56 = arith.constant 0 : index
    %87 = vector.load %arg6[%c0_53, %c1_54, %c0_55, %c0_56] : memref<2x2x8x128xf32, #tpu.memory_space<vmem>>, vector<1x1x8x128xf32>
    %88 = vector.shape_cast %87 : vector<1x1x8x128xf32> to vector<8x128xf32>
    %89 = vector.shape_cast %86 : vector<8x128xf32> to vector<1x1x8x128xf32>
    tpu.vector_store %arg6[%c0_53, %c1_54, %c0_55, %c0_56], %89 {strides = array<i32>} : memref<2x2x8x128xf32, #tpu.memory_space<vmem>>, vector<1x1x8x128xf32>,
    %c1_57 = arith.constant 1 : index
    %c1_58 = arith.constant 1 : index
    %c0_59 = arith.constant 0 : index
    %c0_60 = arith.constant 0 : index
    %90 = vector.load %arg6[%c1_57, %c1_58, %c0_59, %c0_60] : memref<2x2x8x128xf32, #tpu.memory_space<vmem>>, vector<1x1x8x128xf32>
    %91 = vector.shape_cast %90 : vector<1x1x8x128xf32> to vector<8x128xf32>
    %92 = vector.shape_cast %80 : vector<8x128xf32> to vector<1x1x8x128xf32>
    tpu.vector_store %arg6[%c1_57, %c1_58, %c0_59, %c0_60], %92 {strides = array<i32>} : memref<2x2x8x128xf32, #tpu.memory_space<vmem>>, vector<1x1x8x128xf32>,
    return
  }
}

</mosaic_0001>

<llo_original>
// kernel: tpu_custom_call.1
$region0: #{tpu_custom_call.1}
  #allocation0 [shape = 'u32[]', space=smem, size = 0x4, offset = 0x4, fixed_abs, tag = 'smem constant byte address 0x4 - core index']
  #allocation1 [shape = 'u32[144,128]{1,0:T(1,128)}', space=vmem, size = 0x12000, scoped, tag = 'internal scratch']
  %s0 = inlined_call_operand.hbm [shape: f32[8,128], index: 0, kind: input, shape index: {}]
  %s1 = inlined_call_operand.hbm [shape: f32[2,2,8,128], index: 1, kind: input, shape index: {}]
  %s2 = inlined_call_operand.hbm [shape: f32[256,128], index: 2, kind: input, shape index: {}]
  %s3 = inlined_call_operand.hbm [shape: f32[128,1024], index: 3, kind: input, shape index: {}]
  %s4 = inlined_call_operand.hbm [shape: f32[1,1280], index: 4, kind: input, shape index: {}]
  %s5 = inlined_call_operand.hbm [shape: f32[1,256,512], index: 5, kind: input, shape index: {}]
  %s6 = inlined_call_operand.hbm [shape: f32[2,2,8,128], index: 6, kind: output, shape index: {}]
  %s7 = sld [smem:[#allocation0]]
  $region58: #{tpu_custom_call.1} parent=0
    _
  %s9 = ssub.s32 1, %s7
  %s10 = scalar_select 0, %s9, %s7
  $region1: #{tpu_custom_call.1} parent=0
    #allocation2 [shape = 'u8[4096]{0}', space=vmem, size = 0x1000, scoped, tag = 'input window, operand 0, single buffered']
    #allocation3 [shape = 's32[1]{0}', space=sflag, size = 0x4, scoped, tag = 'scoped memory for tpu_custom_call.1']
    #allocation4 [shape = 's32[1]{0}', space=sflag, size = 0x4, scoped, tag = 'scoped memory for tpu_custom_call.1']
    #allocation5 [shape = 'u8[16384]{0}', space=vmem, size = 0x4000, scoped, tag = 'input window, operand 1, single buffered']
    #allocation6 [shape = 's32[1]{0}', space=sflag, size = 0x4, scoped, tag = 'scoped memory for tpu_custom_call.1']
    #allocation7 [shape = 'u8[131072]{0}', space=vmem, size = 0x20000, scoped, tag = 'input window, operand 2, single buffered']
    #allocation8 [shape = 'u8[524288]{0}', space=vmem, size = 0x80000, scoped, tag = 'input window, operand 3, single buffered']
    #allocation9 [shape = 's32[1]{0}', space=sflag, size = 0x4, scoped, tag = 'scoped memory for tpu_custom_call.1']
    #allocation10 [shape = 'u8[5120]{0}', space=vmem, size = 0x1400, scoped, tag = 'input window, operand 4, single buffered']
    #allocation11 [shape = 'u8[524288]{0}', space=vmem, size = 0x80000, scoped, tag = 'input window, operand 5, single buffered']
    #allocation12 [shape = 's32[1]{0}', space=sflag, size = 0x4, scoped, tag = 'scoped memory for tpu_custom_call.1']
    #allocation13 [shape = 'u8[16384]{0}', space=vmem, size = 0x4000, scoped, tag = 'output window, operand 0, single buffered']
    %11 = vsyncpa [#allocation3], 0
    %12 = vsyncpa [#allocation6], 0
    %13 = vsyncpa [#allocation9], 0
    %14 = vsyncpa [#allocation12], 0
    %15 = vsyncpa [#allocation4], 0
    // Predicated region
    $region2: #{tpu_custom_call.1} parent=1 // pred_check
      _
    $region3: #{tpu_custom_call.1} parent=1 // pred_check_branch
      %17 = sbr.rel (0) target = $region5
    $region4: #{tpu_custom_call.1} parent=1 // pred_region
      %s19 = ssub.s32 128, 128
      %20 = vsyncadd [#allocation3], %s19
      %s22 = sshll.u32 [#allocation2], 4
      %s23 = int_to_ptr.vmem [resolvable:$true] %s22
      %25 = dma.hbm_to_vmem [thread:$0]  %s0, 128, %s23, [#allocation3]
    $region5: #{tpu_custom_call.1} parent=1 // pred_fallthru
      _
    // Predicated region
    $region6: #{tpu_custom_call.1} parent=1 // pred_check
      _
    $region7: #{tpu_custom_call.1} parent=1 // pred_check_branch
      %27 = sbr.rel (0) target = $region9
    $region8: #{tpu_custom_call.1} parent=1 // pred_region
      %s29 = ssub.s32 512, 512
      %30 = vsyncadd [#allocation6], %s29
      %s31 = sshll.u32 [#allocation5], 4
      %s32 = int_to_ptr.vmem [resolvable:$true] %s31
      %37 = dma.hbm_to_vmem [thread:$0]  %s1, 512, %s32, [#allocation6], 128, 128, 8
    $region9: #{tpu_custom_call.1} parent=1 // pred_fallthru
      _
    // Predicated region
    $region10: #{tpu_custom_call.1} parent=1 // pred_check
      _
    $region11: #{tpu_custom_call.1} parent=1 // pred_check_branch
      %39 = sbr.rel (0) target = $region13
    $region12: #{tpu_custom_call.1} parent=1 // pred_region
      %s41 = ssub.s32 4096, 4096
      %42 = vsyncadd [#allocation6], %s41
      %s43 = sshll.u32 [#allocation7], 4
      %s44 = int_to_ptr.vmem [resolvable:$true] %s43
      %49 = dma.hbm_to_vmem [thread:$0]  %s2, 4096, %s44, [#allocation6], 128, 128, 8
    $region13: #{tpu_custom_call.1} parent=1 // pred_fallthru
      _
    // Predicated region
    $region14: #{tpu_custom_call.1} parent=1 // pred_check
      _
    $region15: #{tpu_custom_call.1} parent=1 // pred_check_branch
      %51 = sbr.rel (0) target = $region17
    $region16: #{tpu_custom_call.1} parent=1 // pred_region
      %s53 = ssub.s32 16384, 16384
      %54 = vsyncadd [#allocation9], %s53
      %s55 = sshll.u32 [#allocation8], 4
      %s56 = int_to_ptr.vmem [resolvable:$true] %s55
      %61 = dma.hbm_to_vmem [thread:$0]  %s3, 16384, %s56, [#allocation9], 1024, 1024, 64
    $region17: #{tpu_custom_call.1} parent=1 // pred_fallthru
      _
    // Predicated region
    $region18: #{tpu_custom_call.1} parent=1 // pred_check
      _
    $region19: #{tpu_custom_call.1} parent=1 // pred_check_branch
      %63 = sbr.rel (0) target = $region21
    $region20: #{tpu_custom_call.1} parent=1 // pred_region
      %s65 = ssub.s32 160, 160
      %66 = vsyncadd [#allocation9], %s65
      %s68 = sshll.u32 [#allocation10], 4
      %s69 = int_to_ptr.vmem [resolvable:$true] %s68
      %71 = dma.hbm_to_vmem [thread:$0]  %s4, 160, %s69, [#allocation9]
    $region21: #{tpu_custom_call.1} parent=1 // pred_fallthru
      _
    // Predicated region
    $region22: #{tpu_custom_call.1} parent=1 // pred_check
      _
    $region23: #{tpu_custom_call.1} parent=1 // pred_check_branch
      %73 = sbr.rel (0) target = $region25
    $region24: #{tpu_custom_call.1} parent=1 // pred_region
      %s75 = ssub.s32 16384, 16384
      %76 = vsyncadd [#allocation12], %s75
      %s77 = sshll.u32 [#allocation11], 4
      %s78 = int_to_ptr.vmem [resolvable:$true] %s77
      %83 = dma.hbm_to_vmem [thread:$0]  %s5, 16384, %s78, [#allocation12], 512, 512, 32
    $region25: #{tpu_custom_call.1} parent=1 // pred_fallthru
      _
    // Predicated region
    $region26: #{tpu_custom_call.1} parent=1 // pred_check
      _
    $region27: #{tpu_custom_call.1} parent=1 // pred_check_branch
      %85 = sbr.rel (0) target = $region29
    $region28: #{tpu_custom_call.1} parent=1 // pred_region
      %86 = dma.done [#allocation3], 128
    $region29: #{tpu_custom_call.1} parent=1 // pred_fallthru
      _
    // Predicated region
    $region30: #{tpu_custom_call.1} parent=1 // pred_check
      _
    $region31: #{tpu_custom_call.1} parent=1 // pred_check_branch
      %88 = sbr.rel (0) target = $region33
    $region32: #{tpu_custom_call.1} parent=1 // pred_region
      %89 = dma.done [#allocation6], 512
    $region33: #{tpu_custom_call.1} parent=1 // pred_fallthru
      _
    // Predicated region
    $region34: #{tpu_custom_call.1} parent=1 // pred_check
      _
    $region35: #{tpu_custom_call.1} parent=1 // pred_check_branch
      %91 = sbr.rel (0) target = $region37
    $region36: #{tpu_custom_call.1} parent=1 // pred_region
      %92 = dma.done [#allocation6], 4096
    $region37: #{tpu_custom_call.1} parent=1 // pred_fallthru
      _
    // Predicated region
    $region38: #{tpu_custom_call.1} parent=1 // pred_check
      _
    $region39: #{tpu_custom_call.1} parent=1 // pred_check_branch
      %94 = sbr.rel (0) target = $region41
    $region40: #{tpu_custom_call.1} parent=1 // pred_region
      %95 = dma.done [#allocation9], 16384
    $region41: #{tpu_custom_call.1} parent=1 // pred_fallthru
      _
    // Predicated region
    $region42: #{tpu_custom_call.1} parent=1 // pred_check
      _
    $region43: #{tpu_custom_call.1} parent=1 // pred_check_branch
      %97 = sbr.rel (0) target = $region45
    $region44: #{tpu_custom_call.1} parent=1 // pred_region
      %98 = dma.done [#allocation9], 160
    $region45: #{tpu_custom_call.1} parent=1 // pred_fallthru
      _
    // Predicated region
    $region46: #{tpu_custom_call.1} parent=1 // pred_check
      _
    $region47: #{tpu_custom_call.1} parent=1 // pred_check_branch
      %100 = sbr.rel (0) target = $region49
    $region48: #{tpu_custom_call.1} parent=1 // pred_region
      %101 = dma.done [#allocation12], 16384
    $region49: #{tpu_custom_call.1} parent=1 // pred_fallthru
      _
    %v102 = vld [vmem:[#allocation10] sm:$0x1]
    %v103 = vld [vmem:[#allocation10 + $0x1] sm:$0x1]
    %v104 = vld [vmem:[#allocation10 + $0x2] sm:$0xf]
    %v105 = vld [vmem:[#allocation5] sm:$0xff]
    %v106 = vld [vmem:[#allocation7 + $0x80] sm:$0xff]
    %v107 = vld [vmem:[#allocation7 + $0x88] sm:$0xff]
    %v108 = vld [vmem:[#allocation7 + $0x90] sm:$0xff]
    %v109 = vld [vmem:[#allocation7 + $0x98] sm:$0xff]
    %v110 = vld [vmem:[#allocation7 + $0xa0] sm:$0xff]
    %v111 = vld [vmem:[#allocation7 + $0xa8] sm:$0xff]
    %v112 = vld [vmem:[#allocation7 + $0xb0] sm:$0xff]
    %v113 = vld [vmem:[#allocation7 + $0xb8] sm:$0xff]
    %v114 = vld [vmem:[#allocation7 + $0xc0] sm:$0xff]
    %v115 = vld [vmem:[#allocation7 + $0xc8] sm:$0xff]
    %v116 = vld [vmem:[#allocation7 + $0xd0] sm:$0xff]
    %v117 = vld [vmem:[#allocation7 + $0xd8] sm:$0xff]
    %v118 = vld [vmem:[#allocation7 + $0xe0] sm:$0xff]
    %v119 = vld [vmem:[#allocation7 + $0xe8] sm:$0xff]
    %v120 = vld [vmem:[#allocation7 + $0xf0] sm:$0xff]
    %v121 = vld [vmem:[#allocation7 + $0xf8] sm:$0xff]
    %v123 = vlaneseq
    %v124 = vshrl.u32 %v123, 7
    %v125 = vsub.s32 0, %v124
    %v126 = vrot.slane %v103, %v125
    %128 = vmatprep.subr.mxu0 0.0
    %129 = vmatpush1.msra.mxu0 %v121
    %130 = vmatprep.subr.mxu0 0.0
    %131 = vmatpush1.msra.mxu0 %v120
    %132 = vmatprep.subr.mxu0 0.0
    %133 = vmatpush1.msra.mxu0 %v119
    %134 = vmatprep.subr.mxu0 0.0
    %135 = vmatpush1.msra.mxu0 %v118
    %136 = vmatprep.subr.mxu0 0.0
    %137 = vmatpush1.msra.mxu0 %v117
    %138 = vmatprep.subr.mxu0 0.0
    %139 = vmatpush1.msra.mxu0 %v116
    %140 = vmatprep.subr.mxu0 0.0
    %141 = vmatpush1.msra.mxu0 %v115
    %142 = vmatprep.subr.mxu0 0.0
    %143 = vmatpush1.msra.mxu0 %v114
    %144 = vmatprep.subr.mxu0 0.0
    %145 = vmatpush1.msra.mxu0 %v113
    %146 = vmatprep.subr.mxu0 0.0
    %147 = vmatpush1.msra.mxu0 %v112
    %148 = vmatprep.subr.mxu0 0.0
    %149 = vmatpush1.msra.mxu0 %v111
    %150 = vmatprep.subr.mxu0 0.0
    %151 = vmatpush1.msra.mxu0 %v110
    %152 = vmatprep.subr.mxu0 0.0
    %153 = vmatpush1.msra.mxu0 %v109
    %154 = vmatprep.subr.mxu0 0.0
    %155 = vmatpush1.msra.mxu0 %v108
    %156 = vmatprep.subr.mxu0 0.0
    %157 = vmatpush1.msra.mxu0 %v107
    %158 = vmatprep.subr.mxu0 0.0
    %159 = vmatpush1.msra.mxu0 %v106
    %160 = vmatprep.subr.mxu0 0.0
    %161 = vmatpush2.msra.mxu0 0.0
    %162 = vmatprep.subr.mxu0 0.0
    %163 = vmatpush2.msra.mxu0 0.0
    %164 = vmatprep.subr.mxu0 0.0
    %165 = vmatpush2.msra.mxu0 0.0
    %166 = vmatprep.subr.mxu0 0.0
    %167 = vmatpush2.msra.mxu0 0.0
    %168 = vmatprep.subr.mxu0 0.0
    %169 = vmatpush2.msra.mxu0 0.0
    %170 = vmatprep.subr.mxu0 0.0
    %171 = vmatpush2.msra.mxu0 0.0
    %172 = vmatprep.subr.mxu0 0.0
    %173 = vmatpush2.msra.mxu0 0.0
    %174 = vmatprep.subr.mxu0 0.0
    %175 = vmatpush2.msra.mxu0 0.0
    %176 = vmatprep.subr.mxu0 0.0
    %177 = vmatpush2.msra.mxu0 0.0
    %178 = vmatprep.subr.mxu0 0.0
    %179 = vmatpush2.msra.mxu0 0.0
    %180 = vmatprep.subr.mxu0 0.0
    %181 = vmatpush2.msra.mxu0 0.0
    %182 = vmatprep.subr.mxu0 0.0
    %183 = vmatpush2.msra.mxu0 0.0
    %184 = vmatprep.subr.mxu0 0.0
    %185 = vmatpush2.msra.mxu0 0.0
    %186 = vmatprep.subr.mxu0 0.0
    %187 = vmatpush2.msra.mxu0 0.0
    %188 = vmatprep.subr.mxu0 0.0
    %189 = vmatpush2.msra.mxu0 0.0
    %190 = vmatprep.subr.mxu0 0.0
    %191 = vmatpush2.msra.mxu0 0.0
    %192 = vmatprep.mubr.f32.mxu0 0.0
    %193 = vmatmul.mubr.f32.gmra.mxu0 %v105
    %v194 = vpop.f32.mrf.mxu0
    %v195 = vadd.f32 %v126, %v194
    %v196 = vpop.f32.mrf.mxu0
    %197 = vdwg.mxu0
    %v198 = vmax.f32 %v195, 0.0
    %v199 = vld [vmem:[#allocation8 + $0x20] sm:$0xff]
    %v200 = vld [vmem:[#allocation8 + $0x28] sm:$0xff]
    %v201 = vld [vmem:[#allocation8 + $0x30] sm:$0xff]
    %v202 = vld [vmem:[#allocation8 + $0x38] sm:$0xff]
    %v203 = vld [vmem:[#allocation8 + $0x60] sm:$0xff]
    %v204 = vld [vmem:[#allocation8 + $0x68] sm:$0xff]
    %v205 = vld [vmem:[#allocation8 + $0x70] sm:$0xff]
    %v206 = vld [vmem:[#allocation8 + $0x78] sm:$0xff]
    %v207 = vld [vmem:[#allocation8 + $0xa0] sm:$0xff]
    %v208 = vld [vmem:[#allocation8 + $0xa8] sm:$0xff]
    %v209 = vld [vmem:[#allocation8 + $0xb0] sm:$0xff]
    %v210 = vld [vmem:[#allocation8 + $0xb8] sm:$0xff]
    %v211 = vld [vmem:[#allocation8 + $0xe0] sm:$0xff]
    %v212 = vld [vmem:[#allocation8 + $0xe8] sm:$0xff]
    %v213 = vld [vmem:[#allocation8 + $0xf0] sm:$0xff]
    %v214 = vld [vmem:[#allocation8 + $0xf8] sm:$0xff]
    %v215 = vld [vmem:[#allocation8 + $0x120] sm:$0xff]
    %v216 = vld [vmem:[#allocation8 + $0x128] sm:$0xff]
    %v217 = vld [vmem:[#allocation8 + $0x130] sm:$0xff]
    %v218 = vld [vmem:[#allocation8 + $0x138] sm:$0xff]
    %v219 = vld [vmem:[#allocation8 + $0x160] sm:$0xff]
    %v220 = vld [vmem:[#allocation8 + $0x168] sm:$0xff]
    %v221 = vld [vmem:[#allocation8 + $0x170] sm:$0xff]
    %v222 = vld [vmem:[#allocation8 + $0x178] sm:$0xff]
    %v223 = vld [vmem:[#allocation8 + $0x1a0] sm:$0xff]
    %v224 = vld [vmem:[#allocation8 + $0x1a8] sm:$0xff]
    %v225 = vld [vmem:[#allocation8 + $0x1b0] sm:$0xff]
    %v226 = vld [vmem:[#allocation8 + $0x1b8] sm:$0xff]
    %v227 = vld [vmem:[#allocation8 + $0x1e0] sm:$0xff]
    %v228 = vld [vmem:[#allocation8 + $0x1e8] sm:$0xff]
    %v229 = vld [vmem:[#allocation8 + $0x1f0] sm:$0xff]
    %v230 = vld [vmem:[#allocation8 + $0x1f8] sm:$0xff]
    %v231 = vld [vmem:[#allocation8 + $0x220] sm:$0xff]
    %v232 = vld [vmem:[#allocation8 + $0x228] sm:$0xff]
    %v233 = vld [vmem:[#allocation8 + $0x230] sm:$0xff]
    %v234 = vld [vmem:[#allocation8 + $0x238] sm:$0xff]
    %v235 = vld [vmem:[#allocation8 + $0x260] sm:$0xff]
    %v236 = vld [vmem:[#allocation8 + $0x268] sm:$0xff]
    %v237 = vld [vmem:[#allocation8 + $0x270] sm:$0xff]
    %v238 = vld [vmem:[#allocation8 + $0x278] sm:$0xff]
    %v239 = vld [vmem:[#allocation8 + $0x2a0] sm:$0xff]
    %v240 = vld [vmem:[#allocation8 + $0x2a8] sm:$0xff]
    %v241 = vld [vmem:[#allocation8 + $0x2b0] sm:$0xff]
    %v242 = vld [vmem:[#allocation8 + $0x2b8] sm:$0xff]
    %v243 = vld [vmem:[#allocation8 + $0x2e0] sm:$0xff]
    %v244 = vld [vmem:[#allocation8 + $0x2e8] sm:$0xff]
    %v245 = vld [vmem:[#allocation8 + $0x2f0] sm:$0xff]
    %v246 = vld [vmem:[#allocation8 + $0x2f8] sm:$0xff]
    %v247 = vld [vmem:[#allocation8 + $0x320] sm:$0xff]
    %v248 = vld [vmem:[#allocation8 + $0x328] sm:$0xff]
    %v249 = vld [vmem:[#allocation8 + $0x330] sm:$0xff]
    %v250 = vld [vmem:[#allocation8 + $0x338] sm:$0xff]
    %v251 = vld [vmem:[#allocation8 + $0x360] sm:$0xff]
    %v252 = vld [vmem:[#allocation8 + $0x368] sm:$0xff]
    %v253 = vld [vmem:[#allocation8 + $0x370] sm:$0xff]
    %v254 = vld [vmem:[#allocation8 + $0x378] sm:$0xff]
    %v255 = vld [vmem:[#allocation8 + $0x3a0] sm:$0xff]
    %v256 = vld [vmem:[#allocation8 + $0x3a8] sm:$0xff]
    %v257 = vld [vmem:[#allocation8 + $0x3b0] sm:$0xff]
    %v258 = vld [vmem:[#allocation8 + $0x3b8] sm:$0xff]
    %v259 = vld [vmem:[#allocation8 + $0x3e0] sm:$0xff]
    %v260 = vld [vmem:[#allocation8 + $0x3e8] sm:$0xff]
    %v261 = vld [vmem:[#allocation8 + $0x3f0] sm:$0xff]
    %v262 = vld [vmem:[#allocation8 + $0x3f8] sm:$0xff]
    %v264 = vlaneseq
    %v265 = vshrl.u32 %v264, 7
    %v266 = vsub.s32 0, %v265
    %v267 = vrot.slane %v104, %v266
    %v268 = vlaneseq
    %v269 = vshrl.u32 %v268, 7
    %v270 = vsub.s32 1, %v269
    %v271 = vrot.slane %v104, %v270
    %v272 = vlaneseq
    %v273 = vshrl.u32 %v272, 7
    %v274 = vsub.s32 2, %v273
    %v275 = vrot.slane %v104, %v274
    %v276 = vlaneseq
    %v277 = vshrl.u32 %v276, 7
    %v278 = vsub.s32 3, %v277
    %v279 = vrot.slane %v104, %v278
    %284 = vmatprep.subr.mxu0 %v260
    %285 = vmatpush1.msra.mxu0 %v259
    %286 = vmatprep.subr.mxu0 %v256
    %287 = vmatpush1.msra.mxu0 %v255
    %288 = vmatprep.subr.mxu0 %v252
    %289 = vmatpush1.msra.mxu0 %v251
    %290 = vmatprep.subr.mxu0 %v248
    %291 = vmatpush1.msra.mxu0 %v247
    %292 = vmatprep.subr.mxu0 %v244
    %293 = vmatpush1.msra.mxu0 %v243
    %294 = vmatprep.subr.mxu0 %v240
    %295 = vmatpush1.msra.mxu0 %v239
    %296 = vmatprep.subr.mxu0 %v236
    %297 = vmatpush1.msra.mxu0 %v235
    %298 = vmatprep.subr.mxu0 %v232
    %299 = vmatpush1.msra.mxu0 %v231
    %300 = vmatprep.subr.mxu0 %v228
    %301 = vmatpush1.msra.mxu0 %v227
    %302 = vmatprep.subr.mxu0 %v224
    %303 = vmatpush1.msra.mxu0 %v223
    %304 = vmatprep.subr.mxu0 %v220
    %305 = vmatpush1.msra.mxu0 %v219
    %306 = vmatprep.subr.mxu0 %v216
    %307 = vmatpush1.msra.mxu0 %v215
    %308 = vmatprep.subr.mxu0 %v212
    %309 = vmatpush1.msra.mxu0 %v211
    %310 = vmatprep.subr.mxu0 %v208
    %311 = vmatpush1.msra.mxu0 %v207
    %312 = vmatprep.subr.mxu0 %v204
    %313 = vmatpush1.msra.mxu0 %v203
    %314 = vmatprep.subr.mxu0 %v200
    %315 = vmatpush1.msra.mxu0 %v199
    %316 = vmatprep.subr.mxu0 0.0
    %317 = vmatpush2.msra.mxu0 0.0
    %318 = vmatprep.subr.mxu0 0.0
    %319 = vmatpush2.msra.mxu0 0.0
    %320 = vmatprep.subr.mxu0 0.0
    %321 = vmatpush2.msra.mxu0 0.0
    %322 = vmatprep.subr.mxu0 0.0
    %323 = vmatpush2.msra.mxu0 0.0
    %324 = vmatprep.subr.mxu0 0.0
    %325 = vmatpush2.msra.mxu0 0.0
    %326 = vmatprep.subr.mxu0 0.0
    %327 = vmatpush2.msra.mxu0 0.0
    %328 = vmatprep.subr.mxu0 0.0
    %329 = vmatpush2.msra.mxu0 0.0
    %330 = vmatprep.subr.mxu0 0.0
    %331 = vmatpush2.msra.mxu0 0.0
    %332 = vmatprep.subr.mxu0 0.0
    %333 = vmatpush2.msra.mxu0 0.0
    %334 = vmatprep.subr.mxu0 0.0
    %335 = vmatpush2.msra.mxu0 0.0
    %336 = vmatprep.subr.mxu0 0.0
    %337 = vmatpush2.msra.mxu0 0.0
    %338 = vmatprep.subr.mxu0 0.0
    %339 = vmatpush2.msra.mxu0 0.0
    %340 = vmatprep.subr.mxu0 0.0
    %341 = vmatpush2.msra.mxu0 0.0
    %342 = vmatprep.subr.mxu0 0.0
    %343 = vmatpush2.msra.mxu0 0.0
    %344 = vmatprep.subr.mxu0 0.0
    %345 = vmatpush2.msra.mxu0 0.0
    %346 = vmatprep.subr.mxu0 0.0
    %347 = vmatpush2.msra.mxu0 0.0
    %348 = vmatprep.mubr.f32.mxu0 0.0
    %349 = vmatmul.mubr.f32.gmra.mxu0 %v198
    %v350 = vpop.f32.mrf.mxu0
    %v351 = vadd.f32 %v267, %v350
    %v352 = vpop.f32.mrf.mxu0
    %v353 = vadd.f32 %v271, %v352
    %354 = vdwg.mxu0
    %355 = vmatprep.subr.mxu0 %v262
    %356 = vmatpush1.msra.mxu0 %v261
    %357 = vmatprep.subr.mxu0 %v258
    %358 = vmatpush1.msra.mxu0 %v257
    %359 = vmatprep.subr.mxu0 %v254
    %360 = vmatpush1.msra.mxu0 %v253
    %361 = vmatprep.subr.mxu0 %v250
    %362 = vmatpush1.msra.mxu0 %v249
    %363 = vmatprep.subr.mxu0 %v246
    %364 = vmatpush1.msra.mxu0 %v245
    %365 = vmatprep.subr.mxu0 %v242
    %366 = vmatpush1.msra.mxu0 %v241
    %367 = vmatprep.subr.mxu0 %v238
    %368 = vmatpush1.msra.mxu0 %v237
    %369 = vmatprep.subr.mxu0 %v234
    %370 = vmatpush1.msra.mxu0 %v233
    %371 = vmatprep.subr.mxu0 %v230
    %372 = vmatpush1.msra.mxu0 %v229
    %373 = vmatprep.subr.mxu0 %v226
    %374 = vmatpush1.msra.mxu0 %v225
    %375 = vmatprep.subr.mxu0 %v222
    %376 = vmatpush1.msra.mxu0 %v221
    %377 = vmatprep.subr.mxu0 %v218
    %378 = vmatpush1.msra.mxu0 %v217
    %379 = vmatprep.subr.mxu0 %v214
    %380 = vmatpush1.msra.mxu0 %v213
    %381 = vmatprep.subr.mxu0 %v210
    %382 = vmatpush1.msra.mxu0 %v209
    %383 = vmatprep.subr.mxu0 %v206
    %384 = vmatpush1.msra.mxu0 %v205
    %385 = vmatprep.subr.mxu0 %v202
    %386 = vmatpush1.msra.mxu0 %v201
    %387 = vmatprep.subr.mxu0 0.0
    %388 = vmatpush2.msra.mxu0 0.0
    %389 = vmatprep.subr.mxu0 0.0
    %390 = vmatpush2.msra.mxu0 0.0
    %391 = vmatprep.subr.mxu0 0.0
    %392 = vmatpush2.msra.mxu0 0.0
    %393 = vmatprep.subr.mxu0 0.0
    %394 = vmatpush2.msra.mxu0 0.0
    %395 = vmatprep.subr.mxu0 0.0
    %396 = vmatpush2.msra.mxu0 0.0
    %397 = vmatprep.subr.mxu0 0.0
    %398 = vmatpush2.msra.mxu0 0.0
    %399 = vmatprep.subr.mxu0 0.0
    %400 = vmatpush2.msra.mxu0 0.0
    %401 = vmatprep.subr.mxu0 0.0
    %402 = vmatpush2.msra.mxu0 0.0
    %403 = vmatprep.subr.mxu0 0.0
    %404 = vmatpush2.msra.mxu0 0.0
    %405 = vmatprep.subr.mxu0 0.0
    %406 = vmatpush2.msra.mxu0 0.0
    %407 = vmatprep.subr.mxu0 0.0
    %408 = vmatpush2.msra.mxu0 0.0
    %409 = vmatprep.subr.mxu0 0.0
    %410 = vmatpush2.msra.mxu0 0.0
    %411 = vmatprep.subr.mxu0 0.0
    %412 = vmatpush2.msra.mxu0 0.0
    %413 = vmatprep.subr.mxu0 0.0
    %414 = vmatpush2.msra.mxu0 0.0
    %415 = vmatprep.subr.mxu0 0.0
    %416 = vmatpush2.msra.mxu0 0.0
    %417 = vmatprep.subr.mxu0 0.0
    %418 = vmatpush2.msra.mxu0 0.0
    %419 = vmatprep.mubr.f32.mxu0 0.0
    %420 = vmatmul.mubr.f32.gmra.mxu0 %v198
    %v421 = vpop.f32.mrf.mxu0
    %v422 = vadd.f32 %v275, %v421
    %v423 = vpop.f32.mrf.mxu0
    %v424 = vadd.f32 %v279, %v423
    %425 = vdwg.mxu0
    %v426 = vld [vmem:[#allocation10 + $0x6] sm:$0xf]
    %s427 = scalar_lea.vmem [#allocation5], 8
    %v428 = vld [vmem:[%s427] sm:$0xff]
    %v429 = vld [vmem:[#allocation11 + $0x200] sm:$0xff]
    %v430 = vld [vmem:[#allocation11 + $0x208] sm:$0xff]
    %v431 = vld [vmem:[#allocation11 + $0x210] sm:$0xff]
    %v432 = vld [vmem:[#allocation11 + $0x218] sm:$0xff]
    %v433 = vld [vmem:[#allocation11 + $0x220] sm:$0xff]
    %v434 = vld [vmem:[#allocation11 + $0x228] sm:$0xff]
    %v435 = vld [vmem:[#allocation11 + $0x230] sm:$0xff]
    %v436 = vld [vmem:[#allocation11 + $0x238] sm:$0xff]
    %v437 = vld [vmem:[#allocation11 + $0x240] sm:$0xff]
    %v438 = vld [vmem:[#allocation11 + $0x248] sm:$0xff]
    %v439 = vld [vmem:[#allocation11 + $0x250] sm:$0xff]
    %v440 = vld [vmem:[#allocation11 + $0x258] sm:$0xff]
    %v441 = vld [vmem:[#allocation11 + $0x260] sm:$0xff]
    %v442 = vld [vmem:[#allocation11 + $0x268] sm:$0xff]
    %v443 = vld [vmem:[#allocation11 + $0x270] sm:$0xff]
    %v444 = vld [vmem:[#allocation11 + $0x278] sm:$0xff]
    %v445 = vld [vmem:[#allocation11 + $0x280] sm:$0xff]
    %v446 = vld [vmem:[#allocation11 + $0x288] sm:$0xff]
    %v447 = vld [vmem:[#allocation11 + $0x290] sm:$0xff]
    %v448 = vld [vmem:[#allocation11 + $0x298] sm:$0xff]
    %v449 = vld [vmem:[#allocation11 + $0x2a0] sm:$0xff]
    %v450 = vld [vmem:[#allocation11 + $0x2a8] sm:$0xff]
    %v451 = vld [vmem:[#allocation11 + $0x2b0] sm:$0xff]
    %v452 = vld [vmem:[#allocation11 + $0x2b8] sm:$0xff]
    %v453 = vld [vmem:[#allocation11 + $0x2c0] sm:$0xff]
    %v454 = vld [vmem:[#allocation11 + $0x2c8] sm:$0xff]
    %v455 = vld [vmem:[#allocation11 + $0x2d0] sm:$0xff]
    %v456 = vld [vmem:[#allocation11 + $0x2d8] sm:$0xff]
    %v457 = vld [vmem:[#allocation11 + $0x2e0] sm:$0xff]
    %v458 = vld [vmem:[#allocation11 + $0x2e8] sm:$0xff]
    %v459 = vld [vmem:[#allocation11 + $0x2f0] sm:$0xff]
    %v460 = vld [vmem:[#allocation11 + $0x2f8] sm:$0xff]
    %v461 = vld [vmem:[#allocation11 + $0x300] sm:$0xff]
    %v462 = vld [vmem:[#allocation11 + $0x308] sm:$0xff]
    %v463 = vld [vmem:[#allocation11 + $0x310] sm:$0xff]
    %v464 = vld [vmem:[#allocation11 + $0x318] sm:$0xff]
    %v465 = vld [vmem:[#allocation11 + $0x320] sm:$0xff]
    %v466 = vld [vmem:[#allocation11 + $0x328] sm:$0xff]
    %v467 = vld [vmem:[#allocation11 + $0x330] sm:$0xff]
    %v468 = vld [vmem:[#allocation11 + $0x338] sm:$0xff]
    %v469 = vld [vmem:[#allocation11 + $0x340] sm:$0xff]
    %v470 = vld [vmem:[#allocation11 + $0x348] sm:$0xff]
    %v471 = vld [vmem:[#allocation11 + $0x350] sm:$0xff]
    %v472 = vld [vmem:[#allocation11 + $0x358] sm:$0xff]
    %v473 = vld [vmem:[#allocation11 + $0x360] sm:$0xff]
    %v474 = vld [vmem:[#allocation11 + $0x368] sm:$0xff]
    %v475 = vld [vmem:[#allocation11 + $0x370] sm:$0xff]
    %v476 = vld [vmem:[#allocation11 + $0x378] sm:$0xff]
    %v477 = vld [vmem:[#allocation11 + $0x380] sm:$0xff]
    %v478 = vld [vmem:[#allocation11 + $0x388] sm:$0xff]
    %v479 = vld [vmem:[#allocation11 + $0x390] sm:$0xff]
    %v480 = vld [vmem:[#allocation11 + $0x398] sm:$0xff]
    %v481 = vld [vmem:[#allocation11 + $0x3a0] sm:$0xff]
    %v482 = vld [vmem:[#allocation11 + $0x3a8] sm:$0xff]
    %v483 = vld [vmem:[#allocation11 + $0x3b0] sm:$0xff]
    %v484 = vld [vmem:[#allocation11 + $0x3b8] sm:$0xff]
    %v485 = vld [vmem:[#allocation11 + $0x3c0] sm:$0xff]
    %v486 = vld [vmem:[#allocation11 + $0x3c8] sm:$0xff]
    %v487 = vld [vmem:[#allocation11 + $0x3d0] sm:$0xff]
    %v488 = vld [vmem:[#allocation11 + $0x3d8] sm:$0xff]
    %v489 = vld [vmem:[#allocation11 + $0x3e0] sm:$0xff]
    %v490 = vld [vmem:[#allocation11 + $0x3e8] sm:$0xff]
    %v491 = vld [vmem:[#allocation11 + $0x3f0] sm:$0xff]
    %v492 = vld [vmem:[#allocation11 + $0x3f8] sm:$0xff]
    %v494 = vlaneseq
    %v495 = vshrl.u32 %v494, 7
    %v496 = vsub.s32 0, %v495
    %v497 = vrot.slane %v426, %v496
    %v498 = vlaneseq
    %v499 = vshrl.u32 %v498, 7
    %v500 = vsub.s32 1, %v499
    %v501 = vrot.slane %v426, %v500
    %v502 = vlaneseq
    %v503 = vshrl.u32 %v502, 7
    %v504 = vsub.s32 2, %v503
    %v505 = vrot.slane %v426, %v504
    %v506 = vlaneseq
    %v507 = vshrl.u32 %v506, 7
    %v508 = vsub.s32 3, %v507
    %v509 = vrot.slane %v426, %v508
    %514 = vmatprep.subr.mxu0 %v490
    %515 = vmatpush1.msra.mxu0 %v489
    %516 = vmatprep.subr.mxu0 %v486
    %517 = vmatpush1.msra.mxu0 %v485
    %518 = vmatprep.subr.mxu0 %v482
    %519 = vmatpush1.msra.mxu0 %v481
    %520 = vmatprep.subr.mxu0 %v478
    %521 = vmatpush1.msra.mxu0 %v477
    %522 = vmatprep.subr.mxu0 %v474
    %523 = vmatpush1.msra.mxu0 %v473
    %524 = vmatprep.subr.mxu0 %v470
    %525 = vmatpush1.msra.mxu0 %v469
    %526 = vmatprep.subr.mxu0 %v466
    %527 = vmatpush1.msra.mxu0 %v465
    %528 = vmatprep.subr.mxu0 %v462
    %529 = vmatpush1.msra.mxu0 %v461
    %530 = vmatprep.subr.mxu0 %v458
    %531 = vmatpush1.msra.mxu0 %v457
    %532 = vmatprep.subr.mxu0 %v454
    %533 = vmatpush1.msra.mxu0 %v453
    %534 = vmatprep.subr.mxu0 %v450
    %535 = vmatpush1.msra.mxu0 %v449
    %536 = vmatprep.subr.mxu0 %v446
    %537 = vmatpush1.msra.mxu0 %v445
    %538 = vmatprep.subr.mxu0 %v442
    %539 = vmatpush1.msra.mxu0 %v441
    %540 = vmatprep.subr.mxu0 %v438
    %541 = vmatpush1.msra.mxu0 %v437
    %542 = vmatprep.subr.mxu0 %v434
    %543 = vmatpush1.msra.mxu0 %v433
    %544 = vmatprep.subr.mxu0 %v430
    %545 = vmatpush1.msra.mxu0 %v429
    %546 = vmatprep.subr.mxu0 0.0
    %547 = vmatpush2.msra.mxu0 0.0
    %548 = vmatprep.subr.mxu0 0.0
    %549 = vmatpush2.msra.mxu0 0.0
    %550 = vmatprep.subr.mxu0 0.0
    %551 = vmatpush2.msra.mxu0 0.0
    %552 = vmatprep.subr.mxu0 0.0
    %553 = vmatpush2.msra.mxu0 0.0
    %554 = vmatprep.subr.mxu0 0.0
    %555 = vmatpush2.msra.mxu0 0.0
    %556 = vmatprep.subr.mxu0 0.0
    %557 = vmatpush2.msra.mxu0 0.0
    %558 = vmatprep.subr.mxu0 0.0
    %559 = vmatpush2.msra.mxu0 0.0
    %560 = vmatprep.subr.mxu0 0.0
    %561 = vmatpush2.msra.mxu0 0.0
    %562 = vmatprep.subr.mxu0 0.0
    %563 = vmatpush2.msra.mxu0 0.0
    %564 = vmatprep.subr.mxu0 0.0
    %565 = vmatpush2.msra.mxu0 0.0
    %566 = vmatprep.subr.mxu0 0.0
    %567 = vmatpush2.msra.mxu0 0.0
    %568 = vmatprep.subr.mxu0 0.0
    %569 = vmatpush2.msra.mxu0 0.0
    %570 = vmatprep.subr.mxu0 0.0
    %571 = vmatpush2.msra.mxu0 0.0
    %572 = vmatprep.subr.mxu0 0.0
    %573 = vmatpush2.msra.mxu0 0.0
    %574 = vmatprep.subr.mxu0 0.0
    %575 = vmatpush2.msra.mxu0 0.0
    %576 = vmatprep.subr.mxu0 0.0
    %577 = vmatpush2.msra.mxu0 0.0
    %578 = vmatprep.mubr.f32.mxu0 0.0
    %579 = vmatmul.mubr.f32.gmra.mxu0 %v428
    %v580 = vpop.f32.mrf.mxu0
    %v581 = vadd.f32 %v497, %v580
    %v582 = vpop.f32.mrf.mxu0
    %v583 = vadd.f32 %v501, %v582
    %584 = vdwg.mxu0
    %585 = vmatprep.subr.mxu0 %v492
    %586 = vmatpush1.msra.mxu0 %v491
    %587 = vmatprep.subr.mxu0 %v488
    %588 = vmatpush1.msra.mxu0 %v487
    %589 = vmatprep.subr.mxu0 %v484
    %590 = vmatpush1.msra.mxu0 %v483
    %591 = vmatprep.subr.mxu0 %v480
    %592 = vmatpush1.msra.mxu0 %v479
    %593 = vmatprep.subr.mxu0 %v476
    %594 = vmatpush1.msra.mxu0 %v475
    %595 = vmatprep.subr.mxu0 %v472
    %596 = vmatpush1.msra.mxu0 %v471
    %597 = vmatprep.subr.mxu0 %v468
    %598 = vmatpush1.msra.mxu0 %v467
    %599 = vmatprep.subr.mxu0 %v464
    %600 = vmatpush1.msra.mxu0 %v463
    %601 = vmatprep.subr.mxu0 %v460
    %602 = vmatpush1.msra.mxu0 %v459
    %603 = vmatprep.subr.mxu0 %v456
    %604 = vmatpush1.msra.mxu0 %v455
    %605 = vmatprep.subr.mxu0 %v452
    %606 = vmatpush1.msra.mxu0 %v451
    %607 = vmatprep.subr.mxu0 %v448
    %608 = vmatpush1.msra.mxu0 %v447
    %609 = vmatprep.subr.mxu0 %v444
    %610 = vmatpush1.msra.mxu0 %v443
    %611 = vmatprep.subr.mxu0 %v440
    %612 = vmatpush1.msra.mxu0 %v439
    %613 = vmatprep.subr.mxu0 %v436
    %614 = vmatpush1.msra.mxu0 %v435
    %615 = vmatprep.subr.mxu0 %v432
    %616 = vmatpush1.msra.mxu0 %v431
    %617 = vmatprep.subr.mxu0 0.0
    %618 = vmatpush2.msra.mxu0 0.0
    %619 = vmatprep.subr.mxu0 0.0
    %620 = vmatpush2.msra.mxu0 0.0
    %621 = vmatprep.subr.mxu0 0.0
    %622 = vmatpush2.msra.mxu0 0.0
    %623 = vmatprep.subr.mxu0 0.0
    %624 = vmatpush2.msra.mxu0 0.0
    %625 = vmatprep.subr.mxu0 0.0
    %626 = vmatpush2.msra.mxu0 0.0
    %627 = vmatprep.subr.mxu0 0.0
    %628 = vmatpush2.msra.mxu0 0.0
    %629 = vmatprep.subr.mxu0 0.0
    %630 = vmatpush2.msra.mxu0 0.0
    %631 = vmatprep.subr.mxu0 0.0
    %632 = vmatpush2.msra.mxu0 0.0
    %633 = vmatprep.subr.mxu0 0.0
    %634 = vmatpush2.msra.mxu0 0.0
    %635 = vmatprep.subr.mxu0 0.0
    %636 = vmatpush2.msra.mxu0 0.0
    %637 = vmatprep.subr.mxu0 0.0
    %638 = vmatpush2.msra.mxu0 0.0
    %639 = vmatprep.subr.mxu0 0.0
    %640 = vmatpush2.msra.mxu0 0.0
    %641 = vmatprep.subr.mxu0 0.0
    %642 = vmatpush2.msra.mxu0 0.0
    %643 = vmatprep.subr.mxu0 0.0
    %644 = vmatpush2.msra.mxu0 0.0
    %645 = vmatprep.subr.mxu0 0.0
    %646 = vmatpush2.msra.mxu0 0.0
    %647 = vmatprep.subr.mxu0 0.0
    %648 = vmatpush2.msra.mxu0 0.0
    %649 = vmatprep.mubr.f32.mxu0 0.0
    %650 = vmatmul.mubr.f32.gmra.mxu0 %v428
    %v651 = vpop.f32.mrf.mxu0
    %v652 = vadd.f32 %v505, %v651
    %v653 = vpop.f32.mrf.mxu0
    %v654 = vadd.f32 %v509, %v653
    %655 = vdwg.mxu0
    %v656 = vld [vmem:[#allocation2] sm:$0xff]
    %v657 = vld [vmem:[#allocation7] sm:$0xff]
    %v658 = vld [vmem:[#allocation7 + $0x8] sm:$0xff]
    %v659 = vld [vmem:[#allocation7 + $0x10] sm:$0xff]
    %v660 = vld [vmem:[#allocation7 + $0x18] sm:$0xff]
    %v661 = vld [vmem:[#allocation7 + $0x20] sm:$0xff]
    %v662 = vld [vmem:[#allocation7 + $0x28] sm:$0xff]
    %v663 = vld [vmem:[#allocation7 + $0x30] sm:$0xff]
    %v664 = vld [vmem:[#allocation7 + $0x38] sm:$0xff]
    %v665 = vld [vmem:[#allocation7 + $0x40] sm:$0xff]
    %v666 = vld [vmem:[#allocation7 + $0x48] sm:$0xff]
    %v667 = vld [vmem:[#allocation7 + $0x50] sm:$0xff]
    %v668 = vld [vmem:[#allocation7 + $0x58] sm:$0xff]
    %v669 = vld [vmem:[#allocation7 + $0x60] sm:$0xff]
    %v670 = vld [vmem:[#allocation7 + $0x68] sm:$0xff]
    %v671 = vld [vmem:[#allocation7 + $0x70] sm:$0xff]
    %v672 = vld [vmem:[#allocation7 + $0x78] sm:$0xff]
    %v674 = vlaneseq
    %v675 = vshrl.u32 %v674, 7
    %v676 = vsub.s32 0, %v675
    %v677 = vrot.slane %v102, %v676
    %679 = vmatprep.subr.mxu0 0.0
    %680 = vmatpush1.msra.mxu0 %v672
    %681 = vmatprep.subr.mxu0 0.0
    %682 = vmatpush1.msra.mxu0 %v671
    %683 = vmatprep.subr.mxu0 0.0
    %684 = vmatpush1.msra.mxu0 %v670
    %685 = vmatprep.subr.mxu0 0.0
    %686 = vmatpush1.msra.mxu0 %v669
    %687 = vmatprep.subr.mxu0 0.0
    %688 = vmatpush1.msra.mxu0 %v668
    %689 = vmatprep.subr.mxu0 0.0
    %690 = vmatpush1.msra.mxu0 %v667
    %691 = vmatprep.subr.mxu0 0.0
    %692 = vmatpush1.msra.mxu0 %v666
    %693 = vmatprep.subr.mxu0 0.0
    %694 = vmatpush1.msra.mxu0 %v665
    %695 = vmatprep.subr.mxu0 0.0
    %696 = vmatpush1.msra.mxu0 %v664
    %697 = vmatprep.subr.mxu0 0.0
    %698 = vmatpush1.msra.mxu0 %v663
    %699 = vmatprep.subr.mxu0 0.0
    %700 = vmatpush1.msra.mxu0 %v662
    %701 = vmatprep.subr.mxu0 0.0
    %702 = vmatpush1.msra.mxu0 %v661
    %703 = vmatprep.subr.mxu0 0.0
    %704 = vmatpush1.msra.mxu0 %v660
    %705 = vmatprep.subr.mxu0 0.0
    %706 = vmatpush1.msra.mxu0 %v659
    %707 = vmatprep.subr.mxu0 0.0
    %708 = vmatpush1.msra.mxu0 %v658
    %709 = vmatprep.subr.mxu0 0.0
    %710 = vmatpush1.msra.mxu0 %v657
    %711 = vmatprep.subr.mxu0 0.0
    %712 = vmatpush2.msra.mxu0 0.0
    %713 = vmatprep.subr.mxu0 0.0
    %714 = vmatpush2.msra.mxu0 0.0
    %715 = vmatprep.subr.mxu0 0.0
    %716 = vmatpush2.msra.mxu0 0.0
    %717 = vmatprep.subr.mxu0 0.0
    %718 = vmatpush2.msra.mxu0 0.0
    %719 = vmatprep.subr.mxu0 0.0
    %720 = vmatpush2.msra.mxu0 0.0
    %721 = vmatprep.subr.mxu0 0.0
    %722 = vmatpush2.msra.mxu0 0.0
    %723 = vmatprep.subr.mxu0 0.0
    %724 = vmatpush2.msra.mxu0 0.0
    %725 = vmatprep.subr.mxu0 0.0
    %726 = vmatpush2.msra.mxu0 0.0
    %727 = vmatprep.subr.mxu0 0.0
    %728 = vmatpush2.msra.mxu0 0.0
    %729 = vmatprep.subr.mxu0 0.0
    %730 = vmatpush2.msra.mxu0 0.0
    %731 = vmatprep.subr.mxu0 0.0
    %732 = vmatpush2.msra.mxu0 0.0
    %733 = vmatprep.subr.mxu0 0.0
    %734 = vmatpush2.msra.mxu0 0.0
    %735 = vmatprep.subr.mxu0 0.0
    %736 = vmatpush2.msra.mxu0 0.0
    %737 = vmatprep.subr.mxu0 0.0
    %738 = vmatpush2.msra.mxu0 0.0
    %739 = vmatprep.subr.mxu0 0.0
    %740 = vmatpush2.msra.mxu0 0.0
    %741 = vmatprep.subr.mxu0 0.0
    %742 = vmatpush2.msra.mxu0 0.0
    %743 = vmatprep.mubr.f32.mxu0 0.0
    %744 = vmatmul.mubr.f32.gmra.mxu0 %v656
    %v745 = vpop.f32.mrf.mxu0
    %v746 = vadd.f32 %v677, %v745
    %v747 = vpop.f32.mrf.mxu0
    %748 = vdwg.mxu0
    %v749 = vmax.f32 %v746, 0.0
    %v750 = vld [vmem:[#allocation8] sm:$0xff]
    %v751 = vld [vmem:[#allocation8 + $0x8] sm:$0xff]
    %v752 = vld [vmem:[#allocation8 + $0x10] sm:$0xff]
    %v753 = vld [vmem:[#allocation8 + $0x18] sm:$0xff]
    %v754 = vld [vmem:[#allocation8 + $0x40] sm:$0xff]
    %v755 = vld [vmem:[#allocation8 + $0x48] sm:$0xff]
    %v756 = vld [vmem:[#allocation8 + $0x50] sm:$0xff]
    %v757 = vld [vmem:[#allocation8 + $0x58] sm:$0xff]
    %v758 = vld [vmem:[#allocation8 + $0x80] sm:$0xff]
    %v759 = vld [vmem:[#allocation8 + $0x88] sm:$0xff]
    %v760 = vld [vmem:[#allocation8 + $0x90] sm:$0xff]
    %v761 = vld [vmem:[#allocation8 + $0x98] sm:$0xff]
    %v762 = vld [vmem:[#allocation8 + $0xc0] sm:$0xff]
    %v763 = vld [vmem:[#allocation8 + $0xc8] sm:$0xff]
    %v764 = vld [vmem:[#allocation8 + $0xd0] sm:$0xff]
    %v765 = vld [vmem:[#allocation8 + $0xd8] sm:$0xff]
    %v766 = vld [vmem:[#allocation8 + $0x100] sm:$0xff]
    %v767 = vld [vmem:[#allocation8 + $0x108] sm:$0xff]
    %v768 = vld [vmem:[#allocation8 + $0x110] sm:$0xff]
    %v769 = vld [vmem:[#allocation8 + $0x118] sm:$0xff]
    %v770 = vld [vmem:[#allocation8 + $0x140] sm:$0xff]
    %v771 = vld [vmem:[#allocation8 + $0x148] sm:$0xff]
    %v772 = vld [vmem:[#allocation8 + $0x150] sm:$0xff]
    %v773 = vld [vmem:[#allocation8 + $0x158] sm:$0xff]
    %v774 = vld [vmem:[#allocation8 + $0x180] sm:$0xff]
    %v775 = vld [vmem:[#allocation8 + $0x188] sm:$0xff]
    %v776 = vld [vmem:[#allocation8 + $0x190] sm:$0xff]
    %v777 = vld [vmem:[#allocation8 + $0x198] sm:$0xff]
    %v778 = vld [vmem:[#allocation8 + $0x1c0] sm:$0xff]
    %v779 = vld [vmem:[#allocation8 + $0x1c8] sm:$0xff]
    %v780 = vld [vmem:[#allocation8 + $0x1d0] sm:$0xff]
    %v781 = vld [vmem:[#allocation8 + $0x1d8] sm:$0xff]
    %v782 = vld [vmem:[#allocation8 + $0x200] sm:$0xff]
    %v783 = vld [vmem:[#allocation8 + $0x208] sm:$0xff]
    %v784 = vld [vmem:[#allocation8 + $0x210] sm:$0xff]
    %v785 = vld [vmem:[#allocation8 + $0x218] sm:$0xff]
    %v786 = vld [vmem:[#allocation8 + $0x240] sm:$0xff]
    %v787 = vld [vmem:[#allocation8 + $0x248] sm:$0xff]
    %v788 = vld [vmem:[#allocation8 + $0x250] sm:$0xff]
    %v789 = vld [vmem:[#allocation8 + $0x258] sm:$0xff]
    %v790 = vld [vmem:[#allocation8 + $0x280] sm:$0xff]
    %v791 = vld [vmem:[#allocation8 + $0x288] sm:$0xff]
    %v792 = vld [vmem:[#allocation8 + $0x290] sm:$0xff]
    %v793 = vld [vmem:[#allocation8 + $0x298] sm:$0xff]
    %v794 = vld [vmem:[#allocation8 + $0x2c0] sm:$0xff]
    %v795 = vld [vmem:[#allocation8 + $0x2c8] sm:$0xff]
    %v796 = vld [vmem:[#allocation8 + $0x2d0] sm:$0xff]
    %v797 = vld [vmem:[#allocation8 + $0x2d8] sm:$0xff]
    %v798 = vld [vmem:[#allocation8 + $0x300] sm:$0xff]
    %v799 = vld [vmem:[#allocation8 + $0x308] sm:$0xff]
    %v800 = vld [vmem:[#allocation8 + $0x310] sm:$0xff]
    %v801 = vld [vmem:[#allocation8 + $0x318] sm:$0xff]
    %v802 = vld [vmem:[#allocation8 + $0x340] sm:$0xff]
    %v803 = vld [vmem:[#allocation8 + $0x348] sm:$0xff]
    %v804 = vld [vmem:[#allocation8 + $0x350] sm:$0xff]
    %v805 = vld [vmem:[#allocation8 + $0x358] sm:$0xff]
    %v806 = vld [vmem:[#allocation8 + $0x380] sm:$0xff]
    %v807 = vld [vmem:[#allocation8 + $0x388] sm:$0xff]
    %v808 = vld [vmem:[#allocation8 + $0x390] sm:$0xff]
    %v809 = vld [vmem:[#allocation8 + $0x398] sm:$0xff]
    %v810 = vld [vmem:[#allocation8 + $0x3c0] sm:$0xff]
    %v811 = vld [vmem:[#allocation8 + $0x3c8] sm:$0xff]
    %v812 = vld [vmem:[#allocation8 + $0x3d0] sm:$0xff]
    %v813 = vld [vmem:[#allocation8 + $0x3d8] sm:$0xff]
    %814 = vmatprep.subr.mxu0 %v811
    %815 = vmatpush1.msra.mxu0 %v810
    %816 = vmatprep.subr.mxu0 %v807
    %817 = vmatpush1.msra.mxu0 %v806
    %818 = vmatprep.subr.mxu0 %v803
    %819 = vmatpush1.msra.mxu0 %v802
    %820 = vmatprep.subr.mxu0 %v799
    %821 = vmatpush1.msra.mxu0 %v798
    %822 = vmatprep.subr.mxu0 %v795
    %823 = vmatpush1.msra.mxu0 %v794
    %824 = vmatprep.subr.mxu0 %v791
    %825 = vmatpush1.msra.mxu0 %v790
    %826 = vmatprep.subr.mxu0 %v787
    %827 = vmatpush1.msra.mxu0 %v786
    %828 = vmatprep.subr.mxu0 %v783
    %829 = vmatpush1.msra.mxu0 %v782
    %830 = vmatprep.subr.mxu0 %v779
    %831 = vmatpush1.msra.mxu0 %v778
    %832 = vmatprep.subr.mxu0 %v775
    %833 = vmatpush1.msra.mxu0 %v774
    %834 = vmatprep.subr.mxu0 %v771
    %835 = vmatpush1.msra.mxu0 %v770
    %836 = vmatprep.subr.mxu0 %v767
    %837 = vmatpush1.msra.mxu0 %v766
    %838 = vmatprep.subr.mxu0 %v763
    %839 = vmatpush1.msra.mxu0 %v762
    %840 = vmatprep.subr.mxu0 %v759
    %841 = vmatpush1.msra.mxu0 %v758
    %842 = vmatprep.subr.mxu0 %v755
    %843 = vmatpush1.msra.mxu0 %v754
    %844 = vmatprep.subr.mxu0 %v751
    %845 = vmatpush1.msra.mxu0 %v750
    %846 = vmatprep.subr.mxu0 0.0
    %847 = vmatpush2.msra.mxu0 0.0
    %848 = vmatprep.subr.mxu0 0.0
    %849 = vmatpush2.msra.mxu0 0.0
    %850 = vmatprep.subr.mxu0 0.0
    %851 = vmatpush2.msra.mxu0 0.0
    %852 = vmatprep.subr.mxu0 0.0
    %853 = vmatpush2.msra.mxu0 0.0
    %854 = vmatprep.subr.mxu0 0.0
    %855 = vmatpush2.msra.mxu0 0.0
    %856 = vmatprep.subr.mxu0 0.0
    %857 = vmatpush2.msra.mxu0 0.0
    %858 = vmatprep.subr.mxu0 0.0
    %859 = vmatpush2.msra.mxu0 0.0
    %860 = vmatprep.subr.mxu0 0.0
    %861 = vmatpush2.msra.mxu0 0.0
    %862 = vmatprep.subr.mxu0 0.0
    %863 = vmatpush2.msra.mxu0 0.0
    %864 = vmatprep.subr.mxu0 0.0
    %865 = vmatpush2.msra.mxu0 0.0
    %866 = vmatprep.subr.mxu0 0.0
    %867 = vmatpush2.msra.mxu0 0.0
    %868 = vmatprep.subr.mxu0 0.0
    %869 = vmatpush2.msra.mxu0 0.0
    %870 = vmatprep.subr.mxu0 0.0
    %871 = vmatpush2.msra.mxu0 0.0
    %872 = vmatprep.subr.mxu0 0.0
    %873 = vmatpush2.msra.mxu0 0.0
    %874 = vmatprep.subr.mxu0 0.0
    %875 = vmatpush2.msra.mxu0 0.0
    %876 = vmatprep.subr.mxu0 0.0
    %877 = vmatpush2.msra.mxu0 0.0
    %878 = vmatprep.mubr.f32.mxu0 0.0
    %879 = vmatmul.mubr.f32.gmra.mxu0 %v749
    %v880 = vpop.f32.mrf.mxu0
    %v881 = vadd.f32 %v351, %v880
    %v882 = vpop.f32.mrf.mxu0
    %v883 = vadd.f32 %v353, %v882
    %884 = vdwg.mxu0
    %885 = vmatprep.subr.mxu0 %v813
    %886 = vmatpush1.msra.mxu0 %v812
    %887 = vmatprep.subr.mxu0 %v809
    %888 = vmatpush1.msra.mxu0 %v808
    %889 = vmatprep.subr.mxu0 %v805
    %890 = vmatpush1.msra.mxu0 %v804
    %891 = vmatprep.subr.mxu0 %v801
    %892 = vmatpush1.msra.mxu0 %v800
    %893 = vmatprep.subr.mxu0 %v797
    %894 = vmatpush1.msra.mxu0 %v796
    %895 = vmatprep.subr.mxu0 %v793
    %896 = vmatpush1.msra.mxu0 %v792
    %897 = vmatprep.subr.mxu0 %v789
    %898 = vmatpush1.msra.mxu0 %v788
    %899 = vmatprep.subr.mxu0 %v785
    %900 = vmatpush1.msra.mxu0 %v784
    %901 = vmatprep.subr.mxu0 %v781
    %902 = vmatpush1.msra.mxu0 %v780
    %903 = vmatprep.subr.mxu0 %v777
    %904 = vmatpush1.msra.mxu0 %v776
    %905 = vmatprep.subr.mxu0 %v773
    %906 = vmatpush1.msra.mxu0 %v772
    %907 = vmatprep.subr.mxu0 %v769
    %908 = vmatpush1.msra.mxu0 %v768
    %909 = vmatprep.subr.mxu0 %v765
    %910 = vmatpush1.msra.mxu0 %v764
    %911 = vmatprep.subr.mxu0 %v761
    %912 = vmatpush1.msra.mxu0 %v760
    %913 = vmatprep.subr.mxu0 %v757
    %914 = vmatpush1.msra.mxu0 %v756
    %915 = vmatprep.subr.mxu0 %v753
    %916 = vmatpush1.msra.mxu0 %v752
    %917 = vmatprep.subr.mxu0 0.0
    %918 = vmatpush2.msra.mxu0 0.0
    %919 = vmatprep.subr.mxu0 0.0
    %920 = vmatpush2.msra.mxu0 0.0
    %921 = vmatprep.subr.mxu0 0.0
    %922 = vmatpush2.msra.mxu0 0.0
    %923 = vmatprep.subr.mxu0 0.0
    %924 = vmatpush2.msra.mxu0 0.0
    %925 = vmatprep.subr.mxu0 0.0
    %926 = vmatpush2.msra.mxu0 0.0
    %927 = vmatprep.subr.mxu0 0.0
    %928 = vmatpush2.msra.mxu0 0.0
    %929 = vmatprep.subr.mxu0 0.0
    %930 = vmatpush2.msra.mxu0 0.0
    %931 = vmatprep.subr.mxu0 0.0
    %932 = vmatpush2.msra.mxu0 0.0
    %933 = vmatprep.subr.mxu0 0.0
    %934 = vmatpush2.msra.mxu0 0.0
    %935 = vmatprep.subr.mxu0 0.0
    %936 = vmatpush2.msra.mxu0 0.0
    %937 = vmatprep.subr.mxu0 0.0
    %938 = vmatpush2.msra.mxu0 0.0
    %939 = vmatprep.subr.mxu0 0.0
    %940 = vmatpush2.msra.mxu0 0.0
    %941 = vmatprep.subr.mxu0 0.0
    %942 = vmatpush2.msra.mxu0 0.0
    %943 = vmatprep.subr.mxu0 0.0
    %944 = vmatpush2.msra.mxu0 0.0
    %945 = vmatprep.subr.mxu0 0.0
    %946 = vmatpush2.msra.mxu0 0.0
    %947 = vmatprep.subr.mxu0 0.0
    %948 = vmatpush2.msra.mxu0 0.0
    %949 = vmatprep.mubr.f32.mxu0 0.0
    %950 = vmatmul.mubr.f32.gmra.mxu0 %v749
    %v951 = vpop.f32.mrf.mxu0
    %v952 = vadd.f32 %v422, %v951
    %v953 = vpop.f32.mrf.mxu0
    %v954 = vadd.f32 %v424, %v953
    %955 = vdwg.mxu0
    %v956 = vxor.u32 %v881, 2147483648
    %v957 = vxor.u32 %v883, 2147483648
    %v958 = vxor.u32 %v952, 2147483648
    %v959 = vmul.f32 %v956, 1.442695
    %v960 = vpow.pop %v959
    %v961 = vmul.f32 %v957, 1.442695
    %v962 = vpow.pop %v961
    %v963 = vmul.f32 %v958, 1.442695
    %v964 = vpow.pop %v963
    %v965 = vadd.f32 %v960, 1.0
    %v966 = vadd.f32 %v962, 1.0
    %v967 = vadd.f32 %v964, 1.0
    %v968 = vrcp.pop %v965
    %v969 = vmul.f32 1.0, %v968
    %v970 = vrcp.pop %v966
    %v971 = vmul.f32 1.0, %v970
    %v972 = vrcp.pop %v967
    %v973 = vmul.f32 1.0, %v972
    %v974 = vtanh.pop %v954
    %s975 = scalar_lea.vmem [#allocation5], 16
    %v976 = vld [vmem:[%s975] sm:$0xff]
    %v977 = vmul.f32 %v971, %v976
    %v978 = vmul.f32 %v969, %v974
    %v979 = vadd.f32 %v977, %v978
    %v980 = vxor.u32 %v979, 2147483648
    %v981 = vmul.f32 %v980, 1.442695
    %v982 = vpow.pop %v981
    %v983 = vadd.f32 %v982, 1.0
    %v984 = vrcp.pop %v983
    %v985 = vmul.f32 1.0, %v984
    %v986 = vmul.f32 %v973, %v985
    %987 = vst [vmem:[#allocation13] sm:$0xff] %v986
    %s988 = scalar_lea.vmem [#allocation13], 16
    %989 = vst [vmem:[%s988] sm:$0xff] %v979
    %v990 = vld [vmem:[#allocation11] sm:$0xff]
    %v991 = vld [vmem:[#allocation11 + $0x8] sm:$0xff]
    %v992 = vld [vmem:[#allocation11 + $0x10] sm:$0xff]
    %v993 = vld [vmem:[#allocation11 + $0x18] sm:$0xff]
    %v994 = vld [vmem:[#allocation11 + $0x20] sm:$0xff]
    %v995 = vld [vmem:[#allocation11 + $0x28] sm:$0xff]
    %v996 = vld [vmem:[#allocation11 + $0x30] sm:$0xff]
    %v997 = vld [vmem:[#allocation11 + $0x38] sm:$0xff]
    %v998 = vld [vmem:[#allocation11 + $0x40] sm:$0xff]
    %v999 = vld [vmem:[#allocation11 + $0x48] sm:$0xff]
    %v1000 = vld [vmem:[#allocation11 + $0x50] sm:$0xff]
    %v1001 = vld [vmem:[#allocation11 + $0x58] sm:$0xff]
    %v1002 = vld [vmem:[#allocation11 + $0x60] sm:$0xff]
    %v1003 = vld [vmem:[#allocation11 + $0x68] sm:$0xff]
    %v1004 = vld [vmem:[#allocation11 + $0x70] sm:$0xff]
    %v1005 = vld [vmem:[#allocation11 + $0x78] sm:$0xff]
    %v1006 = vld [vmem:[#allocation11 + $0x80] sm:$0xff]
    %v1007 = vld [vmem:[#allocation11 + $0x88] sm:$0xff]
    %v1008 = vld [vmem:[#allocation11 + $0x90] sm:$0xff]
    %v1009 = vld [vmem:[#allocation11 + $0x98] sm:$0xff]
    %v1010 = vld [vmem:[#allocation11 + $0xa0] sm:$0xff]
    %v1011 = vld [vmem:[#allocation11 + $0xa8] sm:$0xff]
    %v1012 = vld [vmem:[#allocation11 + $0xb0] sm:$0xff]
    %v1013 = vld [vmem:[#allocation11 + $0xb8] sm:$0xff]
    %v1014 = vld [vmem:[#allocation11 + $0xc0] sm:$0xff]
    %v1015 = vld [vmem:[#allocation11 + $0xc8] sm:$0xff]
    %v1016 = vld [vmem:[#allocation11 + $0xd0] sm:$0xff]
    %v1017 = vld [vmem:[#allocation11 + $0xd8] sm:$0xff]
    %v1018 = vld [vmem:[#allocation11 + $0xe0] sm:$0xff]
    %v1019 = vld [vmem:[#allocation11 + $0xe8] sm:$0xff]
    %v1020 = vld [vmem:[#allocation11 + $0xf0] sm:$0xff]
    %v1021 = vld [vmem:[#allocation11 + $0xf8] sm:$0xff]
    %v1022 = vld [vmem:[#allocation11 + $0x100] sm:$0xff]
    %v1023 = vld [vmem:[#allocation11 + $0x108] sm:$0xff]
    %v1024 = vld [vmem:[#allocation11 + $0x110] sm:$0xff]
    %v1025 = vld [vmem:[#allocation11 + $0x118] sm:$0xff]
    %v1026 = vld [vmem:[#allocation11 + $0x120] sm:$0xff]
    %v1027 = vld [vmem:[#allocation11 + $0x128] sm:$0xff]
    %v1028 = vld [vmem:[#allocation11 + $0x130] sm:$0xff]
    %v1029 = vld [vmem:[#allocation11 + $0x138] sm:$0xff]
    %v1030 = vld [vmem:[#allocation11 + $0x140] sm:$0xff]
    %v1031 = vld [vmem:[#allocation11 + $0x148] sm:$0xff]
    %v1032 = vld [vmem:[#allocation11 + $0x150] sm:$0xff]
    %v1033 = vld [vmem:[#allocation11 + $0x158] sm:$0xff]
    %v1034 = vld [vmem:[#allocation11 + $0x160] sm:$0xff]
    %v1035 = vld [vmem:[#allocation11 + $0x168] sm:$0xff]
    %v1036 = vld [vmem:[#allocation11 + $0x170] sm:$0xff]
    %v1037 = vld [vmem:[#allocation11 + $0x178] sm:$0xff]
    %v1038 = vld [vmem:[#allocation11 + $0x180] sm:$0xff]
    %v1039 = vld [vmem:[#allocation11 + $0x188] sm:$0xff]
    %v1040 = vld [vmem:[#allocation11 + $0x190] sm:$0xff]
    %v1041 = vld [vmem:[#allocation11 + $0x198] sm:$0xff]
    %v1042 = vld [vmem:[#allocation11 + $0x1a0] sm:$0xff]
    %v1043 = vld [vmem:[#allocation11 + $0x1a8] sm:$0xff]
    %v1044 = vld [vmem:[#allocation11 + $0x1b0] sm:$0xff]
    %v1045 = vld [vmem:[#allocation11 + $0x1b8] sm:$0xff]
    %v1046 = vld [vmem:[#allocation11 + $0x1c0] sm:$0xff]
    %v1047 = vld [vmem:[#allocation11 + $0x1c8] sm:$0xff]
    %v1048 = vld [vmem:[#allocation11 + $0x1d0] sm:$0xff]
    %v1049 = vld [vmem:[#allocation11 + $0x1d8] sm:$0xff]
    %v1050 = vld [vmem:[#allocation11 + $0x1e0] sm:$0xff]
    %v1051 = vld [vmem:[#allocation11 + $0x1e8] sm:$0xff]
    %v1052 = vld [vmem:[#allocation11 + $0x1f0] sm:$0xff]
    %v1053 = vld [vmem:[#allocation11 + $0x1f8] sm:$0xff]
    %1054 = vmatprep.subr.mxu0 %v1051
    %1055 = vmatpush1.msra.mxu0 %v1050
    %1056 = vmatprep.subr.mxu0 %v1047
    %1057 = vmatpush1.msra.mxu0 %v1046
    %1058 = vmatprep.subr.mxu0 %v1043
    %1059 = vmatpush1.msra.mxu0 %v1042
    %1060 = vmatprep.subr.mxu0 %v1039
    %1061 = vmatpush1.msra.mxu0 %v1038
    %1062 = vmatprep.subr.mxu0 %v1035
    %1063 = vmatpush1.msra.mxu0 %v1034
    %1064 = vmatprep.subr.mxu0 %v1031
    %1065 = vmatpush1.msra.mxu0 %v1030
    %1066 = vmatprep.subr.mxu0 %v1027
    %1067 = vmatpush1.msra.mxu0 %v1026
    %1068 = vmatprep.subr.mxu0 %v1023
    %1069 = vmatpush1.msra.mxu0 %v1022
    %1070 = vmatprep.subr.mxu0 %v1019
    %1071 = vmatpush1.msra.mxu0 %v1018
    %1072 = vmatprep.subr.mxu0 %v1015
    %1073 = vmatpush1.msra.mxu0 %v1014
    %1074 = vmatprep.subr.mxu0 %v1011
    %1075 = vmatpush1.msra.mxu0 %v1010
    %1076 = vmatprep.subr.mxu0 %v1007
    %1077 = vmatpush1.msra.mxu0 %v1006
    %1078 = vmatprep.subr.mxu0 %v1003
    %1079 = vmatpush1.msra.mxu0 %v1002
    %1080 = vmatprep.subr.mxu0 %v999
    %1081 = vmatpush1.msra.mxu0 %v998
    %1082 = vmatprep.subr.mxu0 %v995
    %1083 = vmatpush1.msra.mxu0 %v994
    %1084 = vmatprep.subr.mxu0 %v991
    %1085 = vmatpush1.msra.mxu0 %v990
    %1086 = vmatprep.subr.mxu0 0.0
    %1087 = vmatpush2.msra.mxu0 0.0
    %1088 = vmatprep.subr.mxu0 0.0
    %1089 = vmatpush2.msra.mxu0 0.0
    %1090 = vmatprep.subr.mxu0 0.0
    %1091 = vmatpush2.msra.mxu0 0.0
    %1092 = vmatprep.subr.mxu0 0.0
    %1093 = vmatpush2.msra.mxu0 0.0
    %1094 = vmatprep.subr.mxu0 0.0
    %1095 = vmatpush2.msra.mxu0 0.0
    %1096 = vmatprep.subr.mxu0 0.0
    %1097 = vmatpush2.msra.mxu0 0.0
    %1098 = vmatprep.subr.mxu0 0.0
    %1099 = vmatpush2.msra.mxu0 0.0
    %1100 = vmatprep.subr.mxu0 0.0
    %1101 = vmatpush2.msra.mxu0 0.0
    %1102 = vmatprep.subr.mxu0 0.0
    %1103 = vmatpush2.msra.mxu0 0.0
    %1104 = vmatprep.subr.mxu0 0.0
    %1105 = vmatpush2.msra.mxu0 0.0
    %1106 = vmatprep.subr.mxu0 0.0
    %1107 = vmatpush2.msra.mxu0 0.0
    %1108 = vmatprep.subr.mxu0 0.0
    %1109 = vmatpush2.msra.mxu0 0.0
    %1110 = vmatprep.subr.mxu0 0.0
    %1111 = vmatpush2.msra.mxu0 0.0
    %1112 = vmatprep.subr.mxu0 0.0
    %1113 = vmatpush2.msra.mxu0 0.0
    %1114 = vmatprep.subr.mxu0 0.0
    %1115 = vmatpush2.msra.mxu0 0.0
    %1116 = vmatprep.subr.mxu0 0.0
    %1117 = vmatpush2.msra.mxu0 0.0
    %1118 = vmatprep.mubr.f32.mxu0 0.0
    %1119 = vmatmul.mubr.f32.gmra.mxu0 %v986
    %v1120 = vpop.f32.mrf.mxu0
    %v1121 = vadd.f32 %v581, %v1120
    %v1122 = vpop.f32.mrf.mxu0
    %v1123 = vadd.f32 %v583, %v1122
    %1124 = vdwg.mxu0
    %1125 = vmatprep.subr.mxu0 %v1053
    %1126 = vmatpush1.msra.mxu0 %v1052
    %1127 = vmatprep.subr.mxu0 %v1049
    %1128 = vmatpush1.msra.mxu0 %v1048
    %1129 = vmatprep.subr.mxu0 %v1045
    %1130 = vmatpush1.msra.mxu0 %v1044
    %1131 = vmatprep.subr.mxu0 %v1041
    %1132 = vmatpush1.msra.mxu0 %v1040
    %1133 = vmatprep.subr.mxu0 %v1037
    %1134 = vmatpush1.msra.mxu0 %v1036
    %1135 = vmatprep.subr.mxu0 %v1033
    %1136 = vmatpush1.msra.mxu0 %v1032
    %1137 = vmatprep.subr.mxu0 %v1029
    %1138 = vmatpush1.msra.mxu0 %v1028
    %1139 = vmatprep.subr.mxu0 %v1025
    %1140 = vmatpush1.msra.mxu0 %v1024
    %1141 = vmatprep.subr.mxu0 %v1021
    %1142 = vmatpush1.msra.mxu0 %v1020
    %1143 = vmatprep.subr.mxu0 %v1017
    %1144 = vmatpush1.msra.mxu0 %v1016
    %1145 = vmatprep.subr.mxu0 %v1013
    %1146 = vmatpush1.msra.mxu0 %v1012
    %1147 = vmatprep.subr.mxu0 %v1009
    %1148 = vmatpush1.msra.mxu0 %v1008
    %1149 = vmatprep.subr.mxu0 %v1005
    %1150 = vmatpush1.msra.mxu0 %v1004
    %1151 = vmatprep.subr.mxu0 %v1001
    %1152 = vmatpush1.msra.mxu0 %v1000
    %1153 = vmatprep.subr.mxu0 %v997
    %1154 = vmatpush1.msra.mxu0 %v996
    %1155 = vmatprep.subr.mxu0 %v993
    %1156 = vmatpush1.msra.mxu0 %v992
    %1157 = vmatprep.subr.mxu0 0.0
    %1158 = vmatpush2.msra.mxu0 0.0
    %1159 = vmatprep.subr.mxu0 0.0
    %1160 = vmatpush2.msra.mxu0 0.0
    %1161 = vmatprep.subr.mxu0 0.0
    %1162 = vmatpush2.msra.mxu0 0.0
    %1163 = vmatprep.subr.mxu0 0.0
    %1164 = vmatpush2.msra.mxu0 0.0
    %1165 = vmatprep.subr.mxu0 0.0
    %1166 = vmatpush2.msra.mxu0 0.0
    %1167 = vmatprep.subr.mxu0 0.0
    %1168 = vmatpush2.msra.mxu0 0.0
    %1169 = vmatprep.subr.mxu0 0.0
    %1170 = vmatpush2.msra.mxu0 0.0
    %1171 = vmatprep.subr.mxu0 0.0
    %1172 = vmatpush2.msra.mxu0 0.0
    %1173 = vmatprep.subr.mxu0 0.0
    %1174 = vmatpush2.msra.mxu0 0.0
    %1175 = vmatprep.subr.mxu0 0.0
    %1176 = vmatpush2.msra.mxu0 0.0
    %1177 = vmatprep.subr.mxu0 0.0
    %1178 = vmatpush2.msra.mxu0 0.0
    %1179 = vmatprep.subr.mxu0 0.0
    %1180 = vmatpush2.msra.mxu0 0.0
    %1181 = vmatprep.subr.mxu0 0.0
    %1182 = vmatpush2.msra.mxu0 0.0
    %1183 = vmatprep.subr.mxu0 0.0
    %1184 = vmatpush2.msra.mxu0 0.0
    %1185 = vmatprep.subr.mxu0 0.0
    %1186 = vmatpush2.msra.mxu0 0.0
    %1187 = vmatprep.subr.mxu0 0.0
    %1188 = vmatpush2.msra.mxu0 0.0
    %1189 = vmatprep.mubr.f32.mxu0 0.0
    %1190 = vmatmul.mubr.f32.gmra.mxu0 %v986
    %v1191 = vpop.f32.mrf.mxu0
    %v1192 = vadd.f32 %v652, %v1191
    %v1193 = vpop.f32.mrf.mxu0
    %v1194 = vadd.f32 %v654, %v1193
    %1195 = vdwg.mxu0
    %v1196 = vxor.u32 %v1121, 2147483648
    %v1197 = vxor.u32 %v1123, 2147483648
    %v1198 = vxor.u32 %v1192, 2147483648
    %v1199 = vmul.f32 %v1196, 1.442695
    %v1200 = vpow.pop %v1199
    %v1201 = vmul.f32 %v1197, 1.442695
    %v1202 = vpow.pop %v1201
    %v1203 = vmul.f32 %v1198, 1.442695
    %v1204 = vpow.pop %v1203
    %v1205 = vadd.f32 %v1200, 1.0
    %v1206 = vadd.f32 %v1202, 1.0
    %v1207 = vadd.f32 %v1204, 1.0
    %v1208 = vrcp.pop %v1205
    %v1209 = vmul.f32 1.0, %v1208
    %v1210 = vrcp.pop %v1206
    %v1211 = vmul.f32 1.0, %v1210
    %v1212 = vrcp.pop %v1207
    %v1213 = vmul.f32 1.0, %v1212
    %v1214 = vtanh.pop %v1194
    %s1215 = scalar_lea.vmem [#allocation5], 24
    %v1216 = vld [vmem:[%s1215] sm:$0xff]
    %v1217 = vmul.f32 %v1211, %v1216
    %v1218 = vmul.f32 %v1209, %v1214
    %v1219 = vadd.f32 %v1217, %v1218
    %v1220 = vxor.u32 %v1219, 2147483648
    %v1221 = vmul.f32 %v1220, 1.442695
    %v1222 = vpow.pop %v1221
    %v1223 = vadd.f32 %v1222, 1.0
    %v1224 = vrcp.pop %v1223
    %v1225 = vmul.f32 1.0, %v1224
    %v1226 = vmul.f32 %v1213, %v1225
    %s1227 = scalar_lea.vmem [#allocation13], 8
    %1228 = vst [vmem:[%s1227] sm:$0xff] %v1226
    %s1229 = scalar_lea.vmem [#allocation13], 24
    %1230 = vst [vmem:[%s1229] sm:$0xff] %v1219
    // Predicated region
    $region50: #{tpu_custom_call.1} parent=1 // pred_check
      _
    $region51: #{tpu_custom_call.1} parent=1 // pred_check_branch
      %1232 = sbr.rel (0) target = $region53
    $region52: #{tpu_custom_call.1} parent=1 // pred_region
      %s1234 = ssub.s32 512, 512
      %1235 = vsyncadd [#allocation4], %s1234
      %s1236 = sshll.u32 [#allocation13], 4
      %s1237 = int_to_ptr.vmem [resolvable:$true] %s1236
      %1242 = dma.vmem_to_hbm [thread:$0]  %s1237, 512, %s6, [#allocation4], 128, 128, 8
    $region53: #{tpu_custom_call.1} parent=1 // pred_fallthru
      _
    // Predicated region
    $region54: #{tpu_custom_call.1} parent=1 // pred_check
      _
    $region55: #{tpu_custom_call.1} parent=1 // pred_check_branch
      %1244 = sbr.rel (0) target = $region57
    $region56: #{tpu_custom_call.1} parent=1 // pred_region
      %1245 = dma.done [#allocation4], 512
    $region57: #{tpu_custom_call.1} parent=1 // pred_fallthru
      _
    %1246 = vsyncpa [#allocation3], 1
    %1247 = vsyncpa [#allocation6], 1
    %1248 = vsyncpa [#allocation9], 1
    %1249 = vsyncpa [#allocation12], 1
    %1250 = vsyncpa [#allocation4], 1

</llo_original>
